<compile_context>
chip_gen: v7x
topology: tpu7x:2x2x1
jax: 0.10.0
libtpu: 0.0.40
codegen_flags: <defaults>
</compile_context>

<pallas_src>
import functools

import jax
import jax.numpy as jnp
import numpy as np
from jax.experimental import pallas as pl
from jax.experimental.pallas import tpu as pltpu

BN_EPS = 1e-5
_LANE = 128
_VMEM_BUDGET = 24 << 20   # per-kernel working-set budget (safe on v7x: 64 MiB VMEM)
_VMEM_LIMIT = 48 << 20    # scoped-VMEM request; below v7x physical, ample on v5e/v6e


def _round_up(v, m):
    return (v + m - 1) // m * m


# ---------------------------------------------------------------------------
# Kernel helpers (traced inside kernel bodies)
# ---------------------------------------------------------------------------
def _bn_fold(sum_h, sum_h2, fold, gamma, beta, inv_count):
    """Fold per-(tap, channel) column sums across the 4 taps (tiny MXU matmul
    against tile(eye(F2), (4,4)) instead of lane shuffles) and build the BN
    scale/shift in the concatenated-tap ("cat") layout."""
    sum_c = jnp.dot(sum_h, fold, preferred_element_type=jnp.float32)
    sum2_c = jnp.dot(sum_h2, fold, preferred_element_type=jnp.float32)
    mean = sum_c * inv_count
    var = jnp.maximum(sum2_c * inv_count - mean * mean, 0.0)
    inv_std = jax.lax.rsqrt(var + BN_EPS)
    scale = gamma * inv_std
    shift = beta - mean * scale
    return scale, shift


def _sigmoid(y):
    # One EUP transcendental (tanh) instead of exp + approximate reciprocal.
    return 0.5 * jnp.tanh(0.5 * y) + 0.5


# ---------------------------------------------------------------------------
# Kernels
# ---------------------------------------------------------------------------
def _single_pass_kernel(z_ref, w1_ref, w2_ref, fold_ref, params_ref, out_ref,
                        *, n_valid):
    """Whole batch in one grid step.

    z_ref:      (N_pad, Z)     bf16 latent (zero-padded rows)
    w1_ref:     (Z, F4P)       bf16, conv1 taps concatenated, col = s*F2 + f
    w2_ref:     (F4P, C4P)     bf16, conv2 as block-structured matrix (lane-padded)
    fold_ref:   (F4P, F4P)     f32, stat-fold matrix
    params_ref: (3, Pmax)      f32, rows = gamma_cat, beta_cat, bias_cat
    out_ref:    (N_pad, C4P)   f32, col = c*4 + (a*2 + b)
    """
    f4p = w1_ref.shape[1]
    c4p = w2_ref.shape[1]
    inv_count = 1.0 / (4.0 * n_valid)          # BN divisor: N*H*W = 4*N_true

    # conv1 for all 4 spatial taps in a single MXU push (bf16 in, f32 acc).
    h = jnp.dot(z_ref[...], w1_ref[...], preferred_element_type=jnp.float32)
    # Batch statistics (padded zero rows contribute nothing).
    sum_h = jnp.sum(h, axis=0, keepdims=True)
    sum_h2 = jnp.sum(h * h, axis=0, keepdims=True)
    scale, shift = _bn_fold(sum_h, sum_h2, fold_ref[...],
                            params_ref[0:1, :f4p], params_ref[1:2, :f4p],
                            inv_count)
    hb = jnp.maximum(h * scale + shift, 0.0)                      # BN + ReLU (f32)
    y = jnp.dot(hb.astype(w2_ref.dtype), w2_ref[...],
                preferred_element_type=jnp.float32) + params_ref[2:3, :c4p]
    out_ref[...] = _sigmoid(y)


def _two_phase_kernel(z_ref, w1_ref, w2_ref, fold_ref, params_ref, out_ref,
                      stat_ref, *, n_valid, tile_n):
    """Large-batch fallback. grid = (phase, batch_tile).

    phase 0: accumulate per-column sum / sum-of-squares into VMEM scratch.
    phase 1: fold stats -> scale/shift, recompute conv1, BN+ReLU, conv2, sigmoid.
    z is VMEM-resident (constant index_map -> one HBM read total) and sliced
    per tile with pl.ds inside the kernel.
    """
    phase = pl.program_id(0)
    tile = pl.program_id(1)
    f4p = w1_ref.shape[1]
    c4p = w2_ref.shape[1]
    inv_count = 1.0 / (4.0 * n_valid)

    row0 = pl.multiple_of(tile * tile_n, 16)
    z = z_ref[pl.ds(row0, tile_n), :]

    @pl.when(phase == 0)
    def _accumulate_stats():
        @pl.when(tile == 0)
        def _init():
            stat_ref[...] = jnp.zeros_like(stat_ref)

        h = jnp.dot(z, w1_ref[...], preferred_element_type=jnp.float32)
        stat_ref[0:1, :] += jnp.sum(h, axis=0, keepdims=True)
        stat_ref[1:2, :] += jnp.sum(h * h, axis=0, keepdims=True)

    @pl.when(phase == 1)
    def _apply():
        scale, shift = _bn_fold(stat_ref[0:1, :], stat_ref[1:2, :], fold_ref[...],
                                params_ref[0:1, :f4p], params_ref[1:2, :f4p],
                                inv_count)
        # Recompute conv1 (cheaper than round-tripping h through HBM).
        h = jnp.dot(z, w1_ref[...], preferred_element_type=jnp.float32)
        hb = jnp.maximum(h * scale + shift, 0.0)
        y = jnp.dot(hb.astype(w2_ref.dtype), w2_ref[...],
                    preferred_element_type=jnp.float32) + params_ref[2:3, :c4p]
        out_ref[...] = _sigmoid(y)


# ---------------------------------------------------------------------------
# Wrapper
# ---------------------------------------------------------------------------
@functools.partial(jax.jit,
                   static_argnames=("max_single_pass_rows", "two_phase_tile_rows"))
def generator_nodule_forward(x, w1, w2, bias2, gamma, beta,
                             max_single_pass_rows=None, two_phase_tile_rows=2048):
    """Forward matching GeneratorNodule(z_dim, channels_img, features_g).

    x:     (N, z_dim, 1, 1)                    NCHW latent
    w1:    (z_dim, features_g*2, 2, 2)         ConvTranspose2d #1 weight (no bias)
    w2:    (features_g*2, channels_img, 2, 2)  ConvTranspose2d #2 weight
    bias2: (channels_img,)                     ConvTranspose2d #2 bias
    gamma, beta: (features_g*2,)               BatchNorm2d affine parameters
    returns (N, channels_img, 2, 2) float32    NCHW
    """
    n, z_dim = x.shape[0], x.shape[1]
    f2 = w1.shape[1]
    c_img = w2.shape[1]
    f4, c4 = 4 * f2, 4 * c_img
    f4p = _round_up(f4, _LANE)        # lane-pad BN / conv1 "cat" axis
    c4p = _round_up(c4, _LANE)        # lane-pad output -> unmasked full-lane stores
    pmax = max(f4p, c4p)

    z2d = x.reshape(n, z_dim).astype(jnp.bfloat16)

    # conv1: W1cat[z, s*F2 + f] = W1[z, f, kh, kw],  s = kh*2 + kw.  Zero-padded
    # columns give h == 0, and gamma/beta padding of 0 keeps them 0 through BN.
    w1cat = jnp.transpose(w1, (0, 2, 3, 1)).reshape(z_dim, f4)
    w1cat = jnp.pad(w1cat, ((0, 0), (0, f4p - f4))).astype(jnp.bfloat16)

    # conv2 (k=2, s=2, p=1): cropped output position (a, b) uses kernel tap
    # (1-a, 1-b) of input position (a, b).  Block-structured matrix
    #   W2bd[s*F2 + f, c*4 + t] = W2[f, c, 1-a, 1-b] * (s == t),  s, t = a*2 + b,
    # so conv2 is one matmul and the output is channel-major (free NCHW view).
    w2_flip = w2[:, :, ::-1, ::-1].reshape(f2, c_img, 4)
    w2bd = jnp.einsum("fcs,st->sfct", w2_flip,
                      jnp.eye(4, dtype=w2.dtype)).reshape(f4, c4)
    w2bd = jnp.pad(w2bd, ((0, f4p - f4), (0, c4p - c4))).astype(jnp.bfloat16)

    # Stat-fold matrix: (stats @ fold)[:, t*F2 + c] = sum_s stats[:, s*F2 + c].
    fold = jnp.tile(jnp.eye(f2, dtype=jnp.float32), (4, 4))
    fold = jnp.pad(fold, ((0, f4p - f4), (0, f4p - f4)))

    # gamma/beta (tiled per tap) and bias (tiled per spatial position) in one
    # small VMEM-resident parameter block (one DMA descriptor instead of three).
    params = jnp.zeros((3, pmax), jnp.float32)
    params = params.at[0, :f4].set(jnp.tile(gamma.astype(jnp.float32), 4))
    params = params.at[1, :f4].set(jnp.tile(beta.astype(jnp.float32), 4))
    params = params.at[2, :c4].set(jnp.repeat(bias2.astype(jnp.float32), 4))

    # Per-row VMEM cost: z (bf16, double-buffered) + h/hb f32 temporaries (+bf16
    # cast) + out (f32, double-buffered).  Used to size the single-pass cap.
    bytes_per_row = 2 * z_dim * 2 + 3 * f4p * 4 + 2 * c4p * 4
    vmem_rows = max(256, (_VMEM_BUDGET // bytes_per_row) // 16 * 16)
    cap = vmem_rows if max_single_pass_rows is None else max_single_pass_rows

    n_pad1 = _round_up(n, 16)
    if n_pad1 <= cap:
        # ---------------- Single-pass fast path: one grid step. ----------------
        z_pad = jnp.pad(z2d, ((0, n_pad1 - n), (0, 0)))   # zero rows: stats exact
        const = lambda i: (0, 0)
        grid_spec = pltpu.PrefetchScalarGridSpec(
            num_scalar_prefetch=0,
            grid=(1,),
            in_specs=[
                pl.BlockSpec((n_pad1, z_dim), const),      # z      (whole batch)
                pl.BlockSpec((z_dim, f4p), const),         # W1cat  (resident)
                pl.BlockSpec((f4p, c4p), const),           # W2bd   (resident)
                pl.BlockSpec((f4p, f4p), const),           # fold   (resident)
                pl.BlockSpec((3, pmax), const),            # params (resident)
            ],
            out_specs=pl.BlockSpec((n_pad1, c4p), const),
        )
        out_cat = pl.pallas_call(
            functools.partial(_single_pass_kernel, n_valid=n),
            out_shape=jax.ShapeDtypeStruct((n_pad1, c4p), jnp.float32),
            grid_spec=grid_spec,
            compiler_params=pltpu.CompilerParams(
                dimension_semantics=("arbitrary",),
                vmem_limit_bytes=_VMEM_LIMIT),
        )(z_pad, w1cat, w2bd, fold, params)
    else:
        # -------- Two-phase path for batches that exceed the VMEM budget. ------
        tile_cap = max(16, (_VMEM_BUDGET // (3 * f4p * 4 + 2 * c4p * 4)) // 16 * 16)
        tile_n = min(_round_up(min(two_phase_tile_rows, n), 16), tile_cap)
        n_pad = _round_up(n, tile_n)
        n_tiles = n_pad // tile_n
        # TODO(synk): stream z per tile once the resident latent block
        # (n_pad * z_dim * 2 bytes) no longer fits the VMEM budget.
        z_pad = jnp.pad(z2d, ((0, n_pad - n), (0, 0)))
        const = lambda p, i: (0, 0)
        grid_spec = pltpu.PrefetchScalarGridSpec(
            num_scalar_prefetch=0,
            grid=(2, n_tiles),                             # (phase, batch tile)
            in_specs=[
                pl.BlockSpec((n_pad, z_dim), const),       # z resident: 1 DMA total
                pl.BlockSpec((z_dim, f4p), const),         # W1cat  (resident)
                pl.BlockSpec((f4p, c4p), const),           # W2bd   (resident)
                pl.BlockSpec((f4p, f4p), const),           # fold   (resident)
                pl.BlockSpec((3, pmax), const),            # params (resident)
            ],
            # Constant block during phase 0 -> no dead writebacks of
            # uninitialized output tiles; phase 1 visits each block once.
            out_specs=pl.BlockSpec((tile_n, c4p), lambda p, i: (i * p, 0)),
            scratch_shapes=[pltpu.VMEM((2, f4p), jnp.float32)],   # BN stat accum
        )
        out_cat = pl.pallas_call(
            functools.partial(_two_phase_kernel, n_valid=n, tile_n=tile_n),
            out_shape=jax.ShapeDtypeStruct((n_pad, c4p), jnp.float32),
            grid_spec=grid_spec,
            compiler_params=pltpu.CompilerParams(
                # Batch-stat BN is a global reduction over the batch -> the tile
                # axis cannot be "parallel" inside this single fused call.
                dimension_semantics=("arbitrary", "arbitrary"),
                vmem_limit_bytes=_VMEM_LIMIT),
        )(z_pad, w1cat, w2bd, fold, params)

    # (N, C4P) -> crop lane padding -> NCHW (N, C, 2, 2); col = c*4 + (a*2 + b).
    return out_cat[:n, :c4].reshape(n, c_img, 2, 2)


# ---------------------------------------------------------------------------
# Independent numpy reference implementing ConvTranspose2d / BatchNorm literally.
# ---------------------------------------------------------------------------
def _numpy_reference(x, w1, w2, bias2, gamma, beta, eps=BN_EPS):
    x = np.asarray(x, np.float64)
    w1 = np.asarray(w1, np.float64)
    w2 = np.asarray(w2, np.float64)
    bias2 = np.asarray(bias2, np.float64)
    gamma = np.asarray(gamma, np.float64)
    beta = np.asarray(beta, np.float64)
    n, c_img = x.shape[0], w2.shape[1]

    # ConvTranspose2d(z_dim, f2, k=2, s=1, p=0, bias=False) on a 1x1 input.
    h = np.einsum("nz,zfhw->nfhw", x[:, :, 0, 0], w1)            # (N, F2, 2, 2)

    # BatchNorm2d, training mode (biased variance over N, H, W), then ReLU.
    mean = h.mean(axis=(0, 2, 3), keepdims=True)
    var = h.var(axis=(0, 2, 3), keepdims=True)
    h = (h - mean) / np.sqrt(var + eps)
    h = h * gamma.reshape(1, -1, 1, 1) + beta.reshape(1, -1, 1, 1)
    h = np.maximum(h, 0.0)

    # ConvTranspose2d(f2, c_img, k=2, s=2, p=1, bias=True): scatter then crop.
    full = np.zeros((n, c_img, 4, 4), dtype=np.float64)
    for hi in range(2):
        for wi in range(2):
            for kh in range(2):
                for kw in range(2):
                    full[:, :, hi * 2 + kh, wi * 2 + kw] += np.einsum(
                        "nf,fc->nc", h[:, :, hi, wi], w2[:, :, kh, kw])
    out = full[:, :, 1:3, 1:3] + bias2.reshape(1, -1, 1, 1)
    return 1.0 / (1.0 + np.exp(-out))


if __name__ == "__main__":
    # Tolerances sized for bf16 matmul operands (exact tanh-based sigmoid).
    RTOL, ATOL = 5e-3, 5e-4

    N, Z_DIM, CHANNELS_IMG, FEATURES_G = 4, 32, 3, 8
    F2 = FEATURES_G * 2

    key = jax.random.PRNGKey(0)
    k_x, k_w1, k_w2, k_b2, k_g, k_b = jax.random.split(key, 6)
    x = jax.random.normal(k_x, (N, Z_DIM, 1, 1), dtype=jnp.float32)
    w1 = 0.02 * jax.random.normal(k_w1, (Z_DIM, F2, 2, 2), dtype=jnp.float32)
    w2 = 0.02 * jax.random.normal(k_w2, (F2, CHANNELS_IMG, 2, 2), dtype=jnp.float32)
    bias2 = 0.02 * jax.random.normal(k_b2, (CHANNELS_IMG,), dtype=jnp.float32)
    gamma = jnp.ones((F2,), dtype=jnp.float32)    # BatchNorm default init
    beta = jnp.zeros((F2,), dtype=jnp.float32)

    # --- Case 1: fresh-module BN params, tiny batch -> single-pass fast path.
    out = jax.block_until_ready(
        generator_nodule_forward(x, w1, w2, bias2, gamma, beta))
    assert out.shape == (N, CHANNELS_IMG, 2, 2), out.shape
    np.testing.assert_allclose(
        np.asarray(out), _numpy_reference(x, w1, w2, bias2, gamma, beta),
        rtol=RTOL, atol=ATOL)

    # --- Case 2: larger batch with non-trivial affine, still single-pass.
    N2 = 300
    x2 = jax.random.normal(jax.random.PRNGKey(7), (N2, Z_DIM, 1, 1),
                           dtype=jnp.float32)
    gamma2 = 0.5 + jax.random.uniform(k_g, (F2,), dtype=jnp.float32)
    beta2 = 0.1 * jax.random.normal(k_b, (F2,), dtype=jnp.float32)
    ref2 = _numpy_reference(x2, w1, w2, bias2, gamma2, beta2)
    out2 = jax.block_until_ready(
        generator_nodule_forward(x2, w1, w2, bias2, gamma2, beta2))
    assert out2.shape == (N2, CHANNELS_IMG, 2, 2), out2.shape
    np.testing.assert_allclose(np.asarray(out2), ref2, rtol=RTOL, atol=ATOL)

    # --- Case 3: force the two-phase large-batch path (multi-tile stats
    # accumulation, zero-row padding, VMEM-resident z sliced with pl.ds, and
    # the phase-gated output index_map).
    out3 = jax.block_until_ready(
        generator_nodule_forward(x2, w1, w2, bias2, gamma2, beta2,
                                 max_single_pass_rows=0, two_phase_tile_rows=128))
    assert out3.shape == (N2, CHANNELS_IMG, 2, 2), out3.shape
    np.testing.assert_allclose(np.asarray(out3), ref2, rtol=RTOL, atol=ATOL)

    print("KERNEL_OK")
</pallas_src>

<mosaic_0001>
module attributes {stable_mosaic.version = 11 : i64} {
  func.func @_single_pass_kernel(%arg0: i32, %arg1: memref<16x32xbf16, #tpu.memory_space<vmem>>, %arg2: memref<32x128xbf16, #tpu.memory_space<vmem>>, %arg3: memref<128x128xbf16, #tpu.memory_space<vmem>>, %arg4: memref<128x128xf32, #tpu.memory_space<vmem>>, %arg5: memref<3x128xf32, #tpu.memory_space<vmem>>, %arg6: memref<16x128xf32, #tpu.memory_space<vmem>>) attributes {dimension_semantics = [#tpu.dimension_semantics<arbitrary>], iteration_bounds = array<i64: 1>, scalar_prefetch = 0 : i64, scratch_operands = 0 : i64, tpu.core_type = #tpu.core_type<tc>, window_params = [{pipeline_mode = #tpu.pipeline_mode<synchronous>, transform_indices = @transform_0, window_bounds = array<i64: 16, 32>}, {pipeline_mode = #tpu.pipeline_mode<synchronous>, transform_indices = @transform_1, window_bounds = array<i64: 32, 128>}, {pipeline_mode = #tpu.pipeline_mode<synchronous>, transform_indices = @transform_2, window_bounds = array<i64: 128, 128>}, {pipeline_mode = #tpu.pipeline_mode<synchronous>, transform_indices = @transform_3, window_bounds = array<i64: 128, 128>}, {pipeline_mode = #tpu.pipeline_mode<synchronous>, transform_indices = @transform_4, window_bounds = array<i64: 3, 128>}, {pipeline_mode = #tpu.pipeline_mode<synchronous>, transform_indices = @transform_5, window_bounds = array<i64: 16, 128>}]} {
    %c0 = arith.constant 0 : index
    %c0_0 = arith.constant 0 : index
    %0 = vector.load %arg1[%c0, %c0_0] : memref<16x32xbf16, #tpu.memory_space<vmem>>, vector<16x32xbf16>
    %c0_1 = arith.constant 0 : index
    %c0_2 = arith.constant 0 : index
    %1 = vector.load %arg2[%c0_1, %c0_2] : memref<32x128xbf16, #tpu.memory_space<vmem>>, vector<32x128xbf16>
    %cst = arith.constant dense<0.000000e+00> : vector<16x128xf32>
    %2 = tpu.matmul %0, %1, %cst {dimension_numbers = #tpu.dot_dimension_numbers<[1], [0], [0], [1], [0, 0, 1, 1], [], []>} : vector<16x32xbf16>, vector<32x128xbf16>, vector<16x128xf32> -> vector<16x128xf32>
    %cst_3 = arith.constant dense<0.000000e+00> : vector<128xf32>
    %3 = vector.multi_reduction <add>, %2, %cst_3 [0] : vector<16x128xf32> to vector<128xf32>
    %4 = vector.shape_cast %3 : vector<128xf32> to vector<1x128xf32>
    %5 = arith.mulf %2, %2 : vector<16x128xf32>
    %cst_4 = arith.constant dense<0.000000e+00> : vector<128xf32>
    %6 = vector.multi_reduction <add>, %5, %cst_4 [0] : vector<16x128xf32> to vector<128xf32>
    %7 = vector.shape_cast %6 : vector<128xf32> to vector<1x128xf32>
    %c0_5 = arith.constant 0 : index
    %c0_6 = arith.constant 0 : index
    %8 = vector.load %arg4[%c0_5, %c0_6] : memref<128x128xf32, #tpu.memory_space<vmem>>, vector<128x128xf32>
    %c0_7 = arith.constant 0 : index
    %c0_8 = arith.constant 0 : index
    %9 = vector.load %arg5[%c0_7, %c0_8] : memref<3x128xf32, #tpu.memory_space<vmem>>, vector<1x128xf32>
    %c1 = arith.constant 1 : index
    %c0_9 = arith.constant 0 : index
    %10 = vector.load %arg5[%c1, %c0_9] : memref<3x128xf32, #tpu.memory_space<vmem>>, vector<1x128xf32>
    %cst_10 = arith.constant dense<0.000000e+00> : vector<1x128xf32>
    %11 = tpu.matmul %4, %8, %cst_10 {dimension_numbers = #tpu.dot_dimension_numbers<[1], [0], [0], [1], [0, 0, 1, 1], [], []>} : vector<1x128xf32>, vector<128x128xf32>, vector<1x128xf32> -> vector<1x128xf32>
    %cst_11 = arith.constant dense<0.000000e+00> : vector<1x128xf32>
    %12 = tpu.matmul %7, %8, %cst_11 {dimension_numbers = #tpu.dot_dimension_numbers<[1], [0], [0], [1], [0, 0, 1, 1], [], []>} : vector<1x128xf32>, vector<128x128xf32>, vector<1x128xf32> -> vector<1x128xf32>
    %cst_12 = arith.constant 6.250000e-02 : f32
    %13 = vector.broadcast %cst_12 : f32 to vector<1x128xf32>
    %14 = arith.mulf %11, %13 : vector<1x128xf32>
    %cst_13 = arith.constant 6.250000e-02 : f32
    %15 = vector.broadcast %cst_13 : f32 to vector<1x128xf32>
    %16 = arith.mulf %12, %15 : vector<1x128xf32>
    %17 = arith.mulf %14, %14 : vector<1x128xf32>
    %18 = arith.subf %16, %17 : vector<1x128xf32>
    %cst_14 = arith.constant 0.000000e+00 : f32
    %19 = vector.broadcast %cst_14 : f32 to vector<1x128xf32>
    %20 = arith.maximumf %18, %19 : vector<1x128xf32>
    %cst_15 = arith.constant 9.99999974E-6 : f32
    %21 = vector.broadcast %cst_15 : f32 to vector<1x128xf32>
    %22 = arith.addf %20, %21 : vector<1x128xf32>
    %23 = math.rsqrt %22 : vector<1x128xf32>
    %24 = arith.mulf %9, %23 : vector<1x128xf32>
    %25 = arith.mulf %14, %24 : vector<1x128xf32>
    %26 = arith.subf %10, %25 : vector<1x128xf32>
    %27 = vector.broadcast %24 : vector<1x128xf32> to vector<16x128xf32>
    %28 = arith.mulf %2, %27 : vector<16x128xf32>
    %29 = vector.broadcast %26 : vector<1x128xf32> to vector<16x128xf32>
    %30 = arith.addf %28, %29 : vector<16x128xf32>
    %cst_16 = arith.constant 0.000000e+00 : f32
    %31 = vector.broadcast %cst_16 : f32 to vector<16x128xf32>
    %32 = arith.maximumf %30, %31 : vector<16x128xf32>
    %33 = arith.truncf %32 : vector<16x128xf32> to vector<16x128xbf16>
    %c0_17 = arith.constant 0 : index
    %c0_18 = arith.constant 0 : index
    %34 = vector.load %arg3[%c0_17, %c0_18] : memref<128x128xbf16, #tpu.memory_space<vmem>>, vector<128x128xbf16>
    %cst_19 = arith.constant dense<0.000000e+00> : vector<16x128xf32>
    %35 = tpu.matmul %33, %34, %cst_19 {dimension_numbers = #tpu.dot_dimension_numbers<[1], [0], [0], [1], [0, 0, 1, 1], [], []>} : vector<16x128xbf16>, vector<128x128xbf16>, vector<16x128xf32> -> vector<16x128xf32>
    %c2 = arith.constant 2 : index
    %c0_20 = arith.constant 0 : index
    %36 = vector.load %arg5[%c2, %c0_20] : memref<3x128xf32, #tpu.memory_space<vmem>>, vector<1x128xf32>
    %37 = vector.broadcast %36 : vector<1x128xf32> to vector<16x128xf32>
    %38 = arith.addf %35, %37 : vector<16x128xf32>
    %cst_21 = arith.constant 5.000000e-01 : f32
    %39 = vector.broadcast %cst_21 : f32 to vector<16x128xf32>
    %40 = arith.mulf %39, %38 : vector<16x128xf32>
    %41 = math.tanh %40 : vector<16x128xf32>
    %cst_22 = arith.constant 5.000000e-01 : f32
    %42 = vector.broadcast %cst_22 : f32 to vector<16x128xf32>
    %43 = arith.mulf %42, %41 : vector<16x128xf32>
    %cst_23 = arith.constant 5.000000e-01 : f32
    %44 = vector.broadcast %cst_23 : f32 to vector<16x128xf32>
    %45 = arith.addf %43, %44 : vector<16x128xf32>
    %c0_24 = arith.constant 0 : index
    %c0_25 = arith.constant 0 : index
    %46 = vector.load %arg6[%c0_24, %c0_25] : memref<16x128xf32, #tpu.memory_space<vmem>>, vector<16x128xf32>
    tpu.vector_store %arg6[%c0_24, %c0_25], %45 {strides = array<i32>} : memref<16x128xf32, #tpu.memory_space<vmem>>, vector<16x128xf32>,
    return
  }
  func.func @transform_0(%arg0: i32) -> (i32, i32) {
    %c0_i32 = arith.constant 0 : i32
    %c0_i32_0 = arith.constant 0 : i32
    %c0_i32_1 = arith.constant 0 : i32
    return %c0_i32, %c0_i32_0 : i32, i32
  }
  func.func @transform_1(%arg0: i32) -> (i32, i32) {
    %c0_i32 = arith.constant 0 : i32
    %c0_i32_0 = arith.constant 0 : i32
    %c0_i32_1 = arith.constant 0 : i32
    return %c0_i32, %c0_i32_0 : i32, i32
  }
  func.func @transform_2(%arg0: i32) -> (i32, i32) {
    %c0_i32 = arith.constant 0 : i32
    %c0_i32_0 = arith.constant 0 : i32
    %c0_i32_1 = arith.constant 0 : i32
    return %c0_i32, %c0_i32_0 : i32, i32
  }
  func.func @transform_3(%arg0: i32) -> (i32, i32) {
    %c0_i32 = arith.constant 0 : i32
    %c0_i32_0 = arith.constant 0 : i32
    %c0_i32_1 = arith.constant 0 : i32
    return %c0_i32, %c0_i32_0 : i32, i32
  }
  func.func @transform_4(%arg0: i32) -> (i32, i32) {
    %c0_i32 = arith.constant 0 : i32
    %c0_i32_0 = arith.constant 0 : i32
    %c0_i32_1 = arith.constant 0 : i32
    return %c0_i32, %c0_i32_0 : i32, i32
  }
  func.func @transform_5(%arg0: i32) -> (i32, i32) {
    %c0_i32 = arith.constant 0 : i32
    %c0_i32_0 = arith.constant 0 : i32
    %c0_i32_1 = arith.constant 0 : i32
    return %c0_i32, %c0_i32_0 : i32, i32
  }
}

</mosaic_0001>

<llo_original>
// kernel: tile.18
$region0: #{tile.18}
  #allocation0 [shape = 's32[1]{0}', space=sflag, size = 0x4, scoped, tag = 'scoped memory for tile.18']
  %s0 = inlined_call_operand.vmem [shape: f32[16,16], index: 0, kind: input, shape index: {}]
  %s1 = inlined_call_operand.vmem [shape: f32[4,16,4,16], index: 1, kind: output, shape index: {}]
  // Predicated region
  $region2: #{tile.18} parent=0 // pred_check
    _
  $region3: #{tile.18} parent=0 // pred_check_branch
    %3 = sbr.rel (0) target = $region5
  $region4: #{tile.18} parent=0 // pred_region
    _
  $region5: #{tile.18} parent=0 // pred_fallthru
    _
  %v4 = vld [vmem:[%s0] ss:$0 sm:$0xff]
  %5 = vst [vmem:[%s1] sm:$0xf] %v4
  %s6 = scalar_lea.vmem %s1, 64
  %7 = vst [vmem:[%s6] sm:$0xf] %v4
  %s8 = scalar_lea.vmem %s1, 128
  %9 = vst [vmem:[%s8] sm:$0xf] %v4
  %s10 = scalar_lea.vmem %s1, 192
  %11 = vst [vmem:[%s10] sm:$0xf] %v4
  %s12 = scalar_lea.vmem %s0, 1
  %v13 = vld [vmem:[%s12] ss:$0 sm:$0xff]
  %s14 = scalar_lea.vmem %s1, 4
  %15 = vst [vmem:[%s14] sm:$0xf] %v13
  %s16 = scalar_lea.vmem %s1, 68
  %17 = vst [vmem:[%s16] sm:$0xf] %v13
  %s18 = scalar_lea.vmem %s1, 132
  %19 = vst [vmem:[%s18] sm:$0xf] %v13
  %s20 = scalar_lea.vmem %s1, 196
  %21 = vst [vmem:[%s20] sm:$0xf] %v13
  %s22 = scalar_lea.vmem %s0, 2
  %v23 = vld [vmem:[%s22] ss:$0 sm:$0xff]
  %s24 = scalar_lea.vmem %s1, 8
  %25 = vst [vmem:[%s24] sm:$0xf] %v23
  %s26 = scalar_lea.vmem %s1, 72
  %27 = vst [vmem:[%s26] sm:$0xf] %v23
  %s28 = scalar_lea.vmem %s1, 136
  %29 = vst [vmem:[%s28] sm:$0xf] %v23
  %s30 = scalar_lea.vmem %s1, 200
  %31 = vst [vmem:[%s30] sm:$0xf] %v23
  %s32 = scalar_lea.vmem %s0, 3
  %v33 = vld [vmem:[%s32] ss:$0 sm:$0xff]
  %s34 = scalar_lea.vmem %s1, 12
  %35 = vst [vmem:[%s34] sm:$0xf] %v33
  %s36 = scalar_lea.vmem %s1, 76
  %37 = vst [vmem:[%s36] sm:$0xf] %v33
  %s38 = scalar_lea.vmem %s1, 140
  %39 = vst [vmem:[%s38] sm:$0xf] %v33
  %s40 = scalar_lea.vmem %s1, 204
  %41 = vst [vmem:[%s40] sm:$0xf] %v33
  %s42 = scalar_lea.vmem %s0, 4
  %v43 = vld [vmem:[%s42] ss:$0 sm:$0xff]
  %s44 = scalar_lea.vmem %s1, 16
  %45 = vst [vmem:[%s44] sm:$0xf] %v43
  %s46 = scalar_lea.vmem %s1, 80
  %47 = vst [vmem:[%s46] sm:$0xf] %v43
  %s48 = scalar_lea.vmem %s1, 144
  %49 = vst [vmem:[%s48] sm:$0xf] %v43
  %s50 = scalar_lea.vmem %s1, 208
  %51 = vst [vmem:[%s50] sm:$0xf] %v43
  %s52 = scalar_lea.vmem %s0, 5
  %v53 = vld [vmem:[%s52] ss:$0 sm:$0xff]
  %s54 = scalar_lea.vmem %s1, 20
  %55 = vst [vmem:[%s54] sm:$0xf] %v53
  %s56 = scalar_lea.vmem %s1, 84
  %57 = vst [vmem:[%s56] sm:$0xf] %v53
  %s58 = scalar_lea.vmem %s1, 148
  %59 = vst [vmem:[%s58] sm:$0xf] %v53
  %s60 = scalar_lea.vmem %s1, 212
  %61 = vst [vmem:[%s60] sm:$0xf] %v53
  %s62 = scalar_lea.vmem %s0, 6
  %v63 = vld [vmem:[%s62] ss:$0 sm:$0xff]
  %s64 = scalar_lea.vmem %s1, 24
  %65 = vst [vmem:[%s64] sm:$0xf] %v63
  %s66 = scalar_lea.vmem %s1, 88
  %67 = vst [vmem:[%s66] sm:$0xf] %v63
  %s68 = scalar_lea.vmem %s1, 152
  %69 = vst [vmem:[%s68] sm:$0xf] %v63
  %s70 = scalar_lea.vmem %s1, 216
  %71 = vst [vmem:[%s70] sm:$0xf] %v63
  %s72 = scalar_lea.vmem %s0, 7
  %v73 = vld [vmem:[%s72] ss:$0 sm:$0xff]
  %s74 = scalar_lea.vmem %s1, 28
  %75 = vst [vmem:[%s74] sm:$0xf] %v73
  %s76 = scalar_lea.vmem %s1, 92
  %77 = vst [vmem:[%s76] sm:$0xf] %v73
  %s78 = scalar_lea.vmem %s1, 156
  %79 = vst [vmem:[%s78] sm:$0xf] %v73
  %s80 = scalar_lea.vmem %s1, 220
  %81 = vst [vmem:[%s80] sm:$0xf] %v73
  %s82 = scalar_lea.vmem %s0, 8
  %v83 = vld [vmem:[%s82] ss:$0 sm:$0xff]
  %s84 = scalar_lea.vmem %s1, 32
  %85 = vst [vmem:[%s84] sm:$0xf] %v83
  %s86 = scalar_lea.vmem %s1, 96
  %87 = vst [vmem:[%s86] sm:$0xf] %v83
  %s88 = scalar_lea.vmem %s1, 160
  %89 = vst [vmem:[%s88] sm:$0xf] %v83
  %s90 = scalar_lea.vmem %s1, 224
  %91 = vst [vmem:[%s90] sm:$0xf] %v83
  %s92 = scalar_lea.vmem %s0, 8
  %s93 = scalar_lea.vmem %s92, 1
  %v94 = vld [vmem:[%s93] ss:$0 sm:$0xff]
  %s95 = scalar_lea.vmem %s1, 36
  %96 = vst [vmem:[%s95] sm:$0xf] %v94
  %s97 = scalar_lea.vmem %s1, 100
  %98 = vst [vmem:[%s97] sm:$0xf] %v94
  %s99 = scalar_lea.vmem %s1, 164
  %100 = vst [vmem:[%s99] sm:$0xf] %v94
  %s101 = scalar_lea.vmem %s1, 228
  %102 = vst [vmem:[%s101] sm:$0xf] %v94
  %s103 = scalar_lea.vmem %s0, 8
  %s104 = scalar_lea.vmem %s103, 2
  %v105 = vld [vmem:[%s104] ss:$0 sm:$0xff]
  %s106 = scalar_lea.vmem %s1, 40
  %107 = vst [vmem:[%s106] sm:$0xf] %v105
  %s108 = scalar_lea.vmem %s1, 104
  %109 = vst [vmem:[%s108] sm:$0xf] %v105
  %s110 = scalar_lea.vmem %s1, 168
  %111 = vst [vmem:[%s110] sm:$0xf] %v105
  %s112 = scalar_lea.vmem %s1, 232
  %113 = vst [vmem:[%s112] sm:$0xf] %v105
  %s114 = scalar_lea.vmem %s0, 8
  %s115 = scalar_lea.vmem %s114, 3
  %v116 = vld [vmem:[%s115] ss:$0 sm:$0xff]
  %s117 = scalar_lea.vmem %s1, 44
  %118 = vst [vmem:[%s117] sm:$0xf] %v116
  %s119 = scalar_lea.vmem %s1, 108
  %120 = vst [vmem:[%s119] sm:$0xf] %v116
  %s121 = scalar_lea.vmem %s1, 172
  %122 = vst [vmem:[%s121] sm:$0xf] %v116
  %s123 = scalar_lea.vmem %s1, 236
  %124 = vst [vmem:[%s123] sm:$0xf] %v116
  %s125 = scalar_lea.vmem %s0, 8
  %s126 = scalar_lea.vmem %s125, 4
  %v127 = vld [vmem:[%s126] ss:$0 sm:$0xff]
  %s128 = scalar_lea.vmem %s1, 48
  %129 = vst [vmem:[%s128] sm:$0xf] %v127
  %s130 = scalar_lea.vmem %s1, 112
  %131 = vst [vmem:[%s130] sm:$0xf] %v127
  %s132 = scalar_lea.vmem %s1, 176
  %133 = vst [vmem:[%s132] sm:$0xf] %v127
  %s134 = scalar_lea.vmem %s1, 240
  %135 = vst [vmem:[%s134] sm:$0xf] %v127
  %s136 = scalar_lea.vmem %s0, 8
  %s137 = scalar_lea.vmem %s136, 5
  %v138 = vld [vmem:[%s137] ss:$0 sm:$0xff]
  %s139 = scalar_lea.vmem %s1, 52
  %140 = vst [vmem:[%s139] sm:$0xf] %v138
  %s141 = scalar_lea.vmem %s1, 116
  %142 = vst [vmem:[%s141] sm:$0xf] %v138
  %s143 = scalar_lea.vmem %s1, 180
  %144 = vst [vmem:[%s143] sm:$0xf] %v138
  %s145 = scalar_lea.vmem %s1, 244
  %146 = vst [vmem:[%s145] sm:$0xf] %v138
  %s147 = scalar_lea.vmem %s0, 8
  %s148 = scalar_lea.vmem %s147, 6
  %v149 = vld [vmem:[%s148] ss:$0 sm:$0xff]
  %s150 = scalar_lea.vmem %s1, 56
  %151 = vst [vmem:[%s150] sm:$0xf] %v149
  %s152 = scalar_lea.vmem %s1, 120
  %153 = vst [vmem:[%s152] sm:$0xf] %v149
  %s154 = scalar_lea.vmem %s1, 184
  %155 = vst [vmem:[%s154] sm:$0xf] %v149
  %s156 = scalar_lea.vmem %s1, 248
  %157 = vst [vmem:[%s156] sm:$0xf] %v149
  %s158 = scalar_lea.vmem %s0, 8
  %s159 = scalar_lea.vmem %s158, 7
  %v160 = vld [vmem:[%s159] ss:$0 sm:$0xff]
  %s161 = scalar_lea.vmem %s1, 60
  %162 = vst [vmem:[%s161] sm:$0xf] %v160
  %s163 = scalar_lea.vmem %s1, 124
  %164 = vst [vmem:[%s163] sm:$0xf] %v160
  %s165 = scalar_lea.vmem %s1, 188
  %166 = vst [vmem:[%s165] sm:$0xf] %v160
  %s167 = scalar_lea.vmem %s1, 252
  %168 = vst [vmem:[%s167] sm:$0xf] %v160

// kernel: tile.19
$region0: #{tile.19}
  %s0 = inlined_call_operand.vmem [shape: f32[4,16,4,16], index: 0, kind: input, shape index: {}]
  %s1 = inlined_call_operand.vmem [shape: f32[64,64], index: 1, kind: output, shape index: {}]
  $region1: #{tile.19} parent=0
    #allocation0 [shape = 'u8[262144]{0}', space=vmem, size = 0x40000, scoped, tag = 'scoped mem for input reshape']
    %s3 = sshllo.u32 0, 4
    %s4 = smul.addr 4, 63
    %s5 = scalar_lea.vmem %s0, %s4
    %v6 = vld [vmem:[%s5] sm:%s3]
    %s7 = scalar_lea.vmem [#allocation0], 504
    %8 = vst [vmem:[%s7] sm:%s3] %v6
    %s9 = smul.addr 4, 62
    %s10 = scalar_lea.vmem %s0, %s9
    %v11 = vld [vmem:[%s10] sm:%s3]
    %s12 = scalar_lea.vmem [#allocation0], 496
    %13 = vst [vmem:[%s12] sm:%s3] %v11
    %s14 = smul.addr 4, 61
    %s15 = scalar_lea.vmem %s0, %s14
    %v16 = vld [vmem:[%s15] sm:%s3]
    %s17 = scalar_lea.vmem [#allocation0], 488
    %18 = vst [vmem:[%s17] sm:%s3] %v16
    %s19 = smul.addr 4, 60
    %s20 = scalar_lea.vmem %s0, %s19
    %v21 = vld [vmem:[%s20] sm:%s3]
    %s22 = scalar_lea.vmem [#allocation0], 480
    %23 = vst [vmem:[%s22] sm:%s3] %v21
    %s24 = smul.addr 4, 59
    %s25 = scalar_lea.vmem %s0, %s24
    %v26 = vld [vmem:[%s25] sm:%s3]
    %s27 = scalar_lea.vmem [#allocation0], 472
    %28 = vst [vmem:[%s27] sm:%s3] %v26
    %s29 = smul.addr 4, 58
    %s30 = scalar_lea.vmem %s0, %s29
    %v31 = vld [vmem:[%s30] sm:%s3]
    %s32 = scalar_lea.vmem [#allocation0], 464
    %33 = vst [vmem:[%s32] sm:%s3] %v31
    %s34 = smul.addr 4, 57
    %s35 = scalar_lea.vmem %s0, %s34
    %v36 = vld [vmem:[%s35] sm:%s3]
    %s37 = scalar_lea.vmem [#allocation0], 456
    %38 = vst [vmem:[%s37] sm:%s3] %v36
    %s39 = smul.addr 4, 56
    %s40 = scalar_lea.vmem %s0, %s39
    %v41 = vld [vmem:[%s40] sm:%s3]
    %s42 = scalar_lea.vmem [#allocation0], 448
    %43 = vst [vmem:[%s42] sm:%s3] %v41
    %s44 = smul.addr 4, 55
    %s45 = scalar_lea.vmem %s0, %s44
    %v46 = vld [vmem:[%s45] sm:%s3]
    %s47 = scalar_lea.vmem [#allocation0], 440
    %48 = vst [vmem:[%s47] sm:%s3] %v46
    %s49 = smul.addr 4, 54
    %s50 = scalar_lea.vmem %s0, %s49
    %v51 = vld [vmem:[%s50] sm:%s3]
    %s52 = scalar_lea.vmem [#allocation0], 432
    %53 = vst [vmem:[%s52] sm:%s3] %v51
    %s54 = smul.addr 4, 53
    %s55 = scalar_lea.vmem %s0, %s54
    %v56 = vld [vmem:[%s55] sm:%s3]
    %s57 = scalar_lea.vmem [#allocation0], 424
    %58 = vst [vmem:[%s57] sm:%s3] %v56
    %s59 = smul.addr 4, 52
    %s60 = scalar_lea.vmem %s0, %s59
    %v61 = vld [vmem:[%s60] sm:%s3]
    %s62 = scalar_lea.vmem [#allocation0], 416
    %63 = vst [vmem:[%s62] sm:%s3] %v61
    %s64 = smul.addr 4, 51
    %s65 = scalar_lea.vmem %s0, %s64
    %v66 = vld [vmem:[%s65] sm:%s3]
    %s67 = scalar_lea.vmem [#allocation0], 408
    %68 = vst [vmem:[%s67] sm:%s3] %v66
    %s69 = smul.addr 4, 50
    %s70 = scalar_lea.vmem %s0, %s69
    %v71 = vld [vmem:[%s70] sm:%s3]
    %s72 = scalar_lea.vmem [#allocation0], 400
    %73 = vst [vmem:[%s72] sm:%s3] %v71
    %s74 = smul.addr 4, 49
    %s75 = scalar_lea.vmem %s0, %s74
    %v76 = vld [vmem:[%s75] sm:%s3]
    %s77 = scalar_lea.vmem [#allocation0], 392
    %78 = vst [vmem:[%s77] sm:%s3] %v76
    %s79 = smul.addr 4, 48
    %s80 = scalar_lea.vmem %s0, %s79
    %v81 = vld [vmem:[%s80] sm:%s3]
    %s82 = scalar_lea.vmem [#allocation0], 384
    %83 = vst [vmem:[%s82] sm:%s3] %v81
    %s84 = smul.addr 4, 47
    %s85 = scalar_lea.vmem %s0, %s84
    %v86 = vld [vmem:[%s85] sm:%s3]
    %s87 = scalar_lea.vmem [#allocation0], 376
    %88 = vst [vmem:[%s87] sm:%s3] %v86
    %s89 = smul.addr 4, 46
    %s90 = scalar_lea.vmem %s0, %s89
    %v91 = vld [vmem:[%s90] sm:%s3]
    %s92 = scalar_lea.vmem [#allocation0], 368
    %93 = vst [vmem:[%s92] sm:%s3] %v91
    %s94 = smul.addr 4, 45
    %s95 = scalar_lea.vmem %s0, %s94
    %v96 = vld [vmem:[%s95] sm:%s3]
    %s97 = scalar_lea.vmem [#allocation0], 360
    %98 = vst [vmem:[%s97] sm:%s3] %v96
    %s99 = smul.addr 4, 44
    %s100 = scalar_lea.vmem %s0, %s99
    %v101 = vld [vmem:[%s100] sm:%s3]
    %s102 = scalar_lea.vmem [#allocation0], 352
    %103 = vst [vmem:[%s102] sm:%s3] %v101
    %s104 = smul.addr 4, 43
    %s105 = scalar_lea.vmem %s0, %s104
    %v106 = vld [vmem:[%s105] sm:%s3]
    %s107 = scalar_lea.vmem [#allocation0], 344
    %108 = vst [vmem:[%s107] sm:%s3] %v106
    %s109 = smul.addr 4, 42
    %s110 = scalar_lea.vmem %s0, %s109
    %v111 = vld [vmem:[%s110] sm:%s3]
    %s112 = scalar_lea.vmem [#allocation0], 336
    %113 = vst [vmem:[%s112] sm:%s3] %v111
    %s114 = smul.addr 4, 41
    %s115 = scalar_lea.vmem %s0, %s114
    %v116 = vld [vmem:[%s115] sm:%s3]
    %s117 = scalar_lea.vmem [#allocation0], 328
    %118 = vst [vmem:[%s117] sm:%s3] %v116
    %s119 = smul.addr 4, 40
    %s120 = scalar_lea.vmem %s0, %s119
    %v121 = vld [vmem:[%s120] sm:%s3]
    %s122 = scalar_lea.vmem [#allocation0], 320
    %123 = vst [vmem:[%s122] sm:%s3] %v121
    %s124 = smul.addr 4, 39
    %s125 = scalar_lea.vmem %s0, %s124
    %v126 = vld [vmem:[%s125] sm:%s3]
    %s127 = scalar_lea.vmem [#allocation0], 312
    %128 = vst [vmem:[%s127] sm:%s3] %v126
    %s129 = smul.addr 4, 38
    %s130 = scalar_lea.vmem %s0, %s129
    %v131 = vld [vmem:[%s130] sm:%s3]
    %s132 = scalar_lea.vmem [#allocation0], 304
    %133 = vst [vmem:[%s132] sm:%s3] %v131
    %s134 = smul.addr 4, 37
    %s135 = scalar_lea.vmem %s0, %s134
    %v136 = vld [vmem:[%s135] sm:%s3]
    %s137 = scalar_lea.vmem [#allocation0], 296
    %138 = vst [vmem:[%s137] sm:%s3] %v136
    %s139 = smul.addr 4, 36
    %s140 = scalar_lea.vmem %s0, %s139
    %v141 = vld [vmem:[%s140] sm:%s3]
    %s142 = scalar_lea.vmem [#allocation0], 288
    %143 = vst [vmem:[%s142] sm:%s3] %v141
    %s144 = smul.addr 4, 35
    %s145 = scalar_lea.vmem %s0, %s144
    %v146 = vld [vmem:[%s145] sm:%s3]
    %s147 = scalar_lea.vmem [#allocation0], 280
    %148 = vst [vmem:[%s147] sm:%s3] %v146
    %s149 = smul.addr 4, 34
    %s150 = scalar_lea.vmem %s0, %s149
    %v151 = vld [vmem:[%s150] sm:%s3]
    %s152 = scalar_lea.vmem [#allocation0], 272
    %153 = vst [vmem:[%s152] sm:%s3] %v151
    %s154 = smul.addr 4, 33
    %s155 = scalar_lea.vmem %s0, %s154
    %v156 = vld [vmem:[%s155] sm:%s3]
    %s157 = scalar_lea.vmem [#allocation0], 264
    %158 = vst [vmem:[%s157] sm:%s3] %v156
    %s159 = smul.addr 4, 32
    %s160 = scalar_lea.vmem %s0, %s159
    %v161 = vld [vmem:[%s160] sm:%s3]
    %s162 = scalar_lea.vmem [#allocation0], 256
    %163 = vst [vmem:[%s162] sm:%s3] %v161
    %s164 = smul.addr 4, 31
    %s165 = scalar_lea.vmem %s0, %s164
    %v166 = vld [vmem:[%s165] sm:%s3]
    %s167 = scalar_lea.vmem [#allocation0], 248
    %168 = vst [vmem:[%s167] sm:%s3] %v166
    %s169 = smul.addr 4, 30
    %s170 = scalar_lea.vmem %s0, %s169
    %v171 = vld [vmem:[%s170] sm:%s3]
    %s172 = scalar_lea.vmem [#allocation0], 240
    %173 = vst [vmem:[%s172] sm:%s3] %v171
    %s174 = smul.addr 4, 29
    %s175 = scalar_lea.vmem %s0, %s174
    %v176 = vld [vmem:[%s175] sm:%s3]
    %s177 = scalar_lea.vmem [#allocation0], 232
    %178 = vst [vmem:[%s177] sm:%s3] %v176
    %s179 = smul.addr 4, 28
    %s180 = scalar_lea.vmem %s0, %s179
    %v181 = vld [vmem:[%s180] sm:%s3]
    %s182 = scalar_lea.vmem [#allocation0], 224
    %183 = vst [vmem:[%s182] sm:%s3] %v181
    %s184 = smul.addr 4, 27
    %s185 = scalar_lea.vmem %s0, %s184
    %v186 = vld [vmem:[%s185] sm:%s3]
    %s187 = scalar_lea.vmem [#allocation0], 216
    %188 = vst [vmem:[%s187] sm:%s3] %v186
    %s189 = smul.addr 4, 26
    %s190 = scalar_lea.vmem %s0, %s189
    %v191 = vld [vmem:[%s190] sm:%s3]
    %s192 = scalar_lea.vmem [#allocation0], 208
    %193 = vst [vmem:[%s192] sm:%s3] %v191
    %s194 = smul.addr 4, 25
    %s195 = scalar_lea.vmem %s0, %s194
    %v196 = vld [vmem:[%s195] sm:%s3]
    %s197 = scalar_lea.vmem [#allocation0], 200
    %198 = vst [vmem:[%s197] sm:%s3] %v196
    %s199 = smul.addr 4, 24
    %s200 = scalar_lea.vmem %s0, %s199
    %v201 = vld [vmem:[%s200] sm:%s3]
    %s202 = scalar_lea.vmem [#allocation0], 192
    %203 = vst [vmem:[%s202] sm:%s3] %v201
    %s204 = smul.addr 4, 23
    %s205 = scalar_lea.vmem %s0, %s204
    %v206 = vld [vmem:[%s205] sm:%s3]
    %s207 = scalar_lea.vmem [#allocation0], 184
    %208 = vst [vmem:[%s207] sm:%s3] %v206
    %s209 = smul.addr 4, 22
    %s210 = scalar_lea.vmem %s0, %s209
    %v211 = vld [vmem:[%s210] sm:%s3]
    %s212 = scalar_lea.vmem [#allocation0], 176
    %213 = vst [vmem:[%s212] sm:%s3] %v211
    %s214 = smul.addr 4, 21
    %s215 = scalar_lea.vmem %s0, %s214
    %v216 = vld [vmem:[%s215] sm:%s3]
    %s217 = scalar_lea.vmem [#allocation0], 168
    %218 = vst [vmem:[%s217] sm:%s3] %v216
    %s219 = smul.addr 4, 20
    %s220 = scalar_lea.vmem %s0, %s219
    %v221 = vld [vmem:[%s220] sm:%s3]
    %s222 = scalar_lea.vmem [#allocation0], 160
    %223 = vst [vmem:[%s222] sm:%s3] %v221
    %s224 = smul.addr 4, 19
    %s225 = scalar_lea.vmem %s0, %s224
    %v226 = vld [vmem:[%s225] sm:%s3]
    %s227 = scalar_lea.vmem [#allocation0], 152
    %228 = vst [vmem:[%s227] sm:%s3] %v226
    %s229 = smul.addr 4, 18
    %s230 = scalar_lea.vmem %s0, %s229
    %v231 = vld [vmem:[%s230] sm:%s3]
    %s232 = scalar_lea.vmem [#allocation0], 144
    %233 = vst [vmem:[%s232] sm:%s3] %v231
    %s234 = smul.addr 4, 17
    %s235 = scalar_lea.vmem %s0, %s234
    %v236 = vld [vmem:[%s235] sm:%s3]
    %s237 = scalar_lea.vmem [#allocation0], 136
    %238 = vst [vmem:[%s237] sm:%s3] %v236
    %s239 = smul.addr 4, 16
    %s240 = scalar_lea.vmem %s0, %s239
    %v241 = vld [vmem:[%s240] sm:%s3]
    %s242 = scalar_lea.vmem [#allocation0], 128
    %243 = vst [vmem:[%s242] sm:%s3] %v241
    %s244 = smul.addr 4, 15
    %s245 = scalar_lea.vmem %s0, %s244
    %v246 = vld [vmem:[%s245] sm:%s3]
    %s247 = scalar_lea.vmem [#allocation0], 120
    %248 = vst [vmem:[%s247] sm:%s3] %v246
    %s249 = smul.addr 4, 14
    %s250 = scalar_lea.vmem %s0, %s249
    %v251 = vld [vmem:[%s250] sm:%s3]
    %s252 = scalar_lea.vmem [#allocation0], 112
    %253 = vst [vmem:[%s252] sm:%s3] %v251
    %s254 = smul.addr 4, 13
    %s255 = scalar_lea.vmem %s0, %s254
    %v256 = vld [vmem:[%s255] sm:%s3]
    %s257 = scalar_lea.vmem [#allocation0], 104
    %258 = vst [vmem:[%s257] sm:%s3] %v256
    %s259 = smul.addr 4, 12
    %s260 = scalar_lea.vmem %s0, %s259
    %v261 = vld [vmem:[%s260] sm:%s3]
    %s262 = scalar_lea.vmem [#allocation0], 96
    %263 = vst [vmem:[%s262] sm:%s3] %v261
    %s264 = smul.addr 4, 11
    %s265 = scalar_lea.vmem %s0, %s264
    %v266 = vld [vmem:[%s265] sm:%s3]
    %s267 = scalar_lea.vmem [#allocation0], 88
    %268 = vst [vmem:[%s267] sm:%s3] %v266
    %s269 = smul.addr 4, 10
    %s270 = scalar_lea.vmem %s0, %s269
    %v271 = vld [vmem:[%s270] sm:%s3]
    %s272 = scalar_lea.vmem [#allocation0], 80
    %273 = vst [vmem:[%s272] sm:%s3] %v271
    %s274 = smul.addr 4, 9
    %s275 = scalar_lea.vmem %s0, %s274
    %v276 = vld [vmem:[%s275] sm:%s3]
    %s277 = scalar_lea.vmem [#allocation0], 72
    %278 = vst [vmem:[%s277] sm:%s3] %v276
    %s279 = smul.addr 4, 8
    %s280 = scalar_lea.vmem %s0, %s279
    %v281 = vld [vmem:[%s280] sm:%s3]
    %s282 = scalar_lea.vmem [#allocation0], 64
    %283 = vst [vmem:[%s282] sm:%s3] %v281
    %s284 = smul.addr 4, 7
    %s285 = scalar_lea.vmem %s0, %s284
    %v286 = vld [vmem:[%s285] sm:%s3]
    %s287 = scalar_lea.vmem [#allocation0], 56
    %288 = vst [vmem:[%s287] sm:%s3] %v286
    %s289 = smul.addr 4, 6
    %s290 = scalar_lea.vmem %s0, %s289
    %v291 = vld [vmem:[%s290] sm:%s3]
    %s292 = scalar_lea.vmem [#allocation0], 48
    %293 = vst [vmem:[%s292] sm:%s3] %v291
    %s294 = smul.addr 4, 5
    %s295 = scalar_lea.vmem %s0, %s294
    %v296 = vld [vmem:[%s295] sm:%s3]
    %s297 = scalar_lea.vmem [#allocation0], 40
    %298 = vst [vmem:[%s297] sm:%s3] %v296
    %s299 = smul.addr 4, 4
    %s300 = scalar_lea.vmem %s0, %s299
    %v301 = vld [vmem:[%s300] sm:%s3]
    %s302 = scalar_lea.vmem [#allocation0], 32
    %303 = vst [vmem:[%s302] sm:%s3] %v301
    %s304 = smul.addr 4, 3
    %s305 = scalar_lea.vmem %s0, %s304
    %v306 = vld [vmem:[%s305] sm:%s3]
    %s307 = scalar_lea.vmem [#allocation0], 24
    %308 = vst [vmem:[%s307] sm:%s3] %v306
    %s309 = smul.addr 4, 2
    %s310 = scalar_lea.vmem %s0, %s309
    %v311 = vld [vmem:[%s310] sm:%s3]
    %s312 = scalar_lea.vmem [#allocation0], 16
    %313 = vst [vmem:[%s312] sm:%s3] %v311
    %s314 = scalar_lea.vmem %s0, 4
    %v315 = vld [vmem:[%s314] sm:%s3]
    %s316 = scalar_lea.vmem [#allocation0], 8
    %317 = vst [vmem:[%s316] sm:%s3] %v315
    %v318 = vld [vmem:[%s0] sm:%s3]
    %319 = vst [vmem:[#allocation0] sm:%s3] %v318
    %v320 = vld [vmem:[#allocation0] ss:$8 sm:$0xf]
    %v321 = vld [vmem:[#allocation0] ss:$8 sm:$0xf0]
    %vm322 = vcmask 1047556
    %v323 = vsel %vm322, %v321, %v320
    %vm324 = vcmask 130048
    %325 = vst.msk [vmem:[%s1] sm:$0xff] %vm324, %v323
    %s326 = scalar_lea.vmem [#allocation0], 64
    %v327 = vld [vmem:[%s326] ss:$8 sm:$0xf]
    %s328 = scalar_lea.vmem [#allocation0], 64
    %v329 = vld [vmem:[%s328] ss:$8 sm:$0xf0]
    %vm330 = vcmask 1047556
    %v331 = vsel %vm330, %v329, %v327
    %vm332 = vcmask 130048
    %s333 = scalar_lea.vmem %s1, 8
    %334 = vst.msk [vmem:[%s333] sm:$0xff] %vm332, %v331
    %s335 = scalar_lea.vmem [#allocation0], 128
    %v336 = vld [vmem:[%s335] ss:$8 sm:$0xf]
    %s337 = scalar_lea.vmem [#allocation0], 128
    %v338 = vld [vmem:[%s337] ss:$8 sm:$0xf0]
    %vm339 = vcmask 1047556
    %v340 = vsel %vm339, %v338, %v336
    %vm341 = vcmask 130048
    %s342 = scalar_lea.vmem %s1, 16
    %343 = vst.msk [vmem:[%s342] sm:$0xff] %vm341, %v340
    %s344 = scalar_lea.vmem [#allocation0], 192
    %v345 = vld [vmem:[%s344] ss:$8 sm:$0xf]
    %s346 = scalar_lea.vmem [#allocation0], 192
    %v347 = vld [vmem:[%s346] ss:$8 sm:$0xf0]
    %vm348 = vcmask 1047556
    %v349 = vsel %vm348, %v347, %v345
    %vm350 = vcmask 130048
    %s351 = scalar_lea.vmem %s1, 24
    %352 = vst.msk [vmem:[%s351] sm:$0xff] %vm350, %v349
    %s353 = scalar_lea.vmem [#allocation0], 256
    %v354 = vld [vmem:[%s353] ss:$8 sm:$0xf]
    %s355 = scalar_lea.vmem [#allocation0], 256
    %v356 = vld [vmem:[%s355] ss:$8 sm:$0xf0]
    %vm357 = vcmask 1047556
    %v358 = vsel %vm357, %v356, %v354
    %vm359 = vcmask 130048
    %s360 = scalar_lea.vmem %s1, 32
    %361 = vst.msk [vmem:[%s360] sm:$0xff] %vm359, %v358
    %s362 = scalar_lea.vmem [#allocation0], 320
    %v363 = vld [vmem:[%s362] ss:$8 sm:$0xf]
    %s364 = scalar_lea.vmem [#allocation0], 320
    %v365 = vld [vmem:[%s364] ss:$8 sm:$0xf0]
    %vm366 = vcmask 1047556
    %v367 = vsel %vm366, %v365, %v363
    %vm368 = vcmask 130048
    %s369 = scalar_lea.vmem %s1, 40
    %370 = vst.msk [vmem:[%s369] sm:$0xff] %vm368, %v367
    %s371 = scalar_lea.vmem [#allocation0], 384
    %v372 = vld [vmem:[%s371] ss:$8 sm:$0xf]
    %s373 = scalar_lea.vmem [#allocation0], 384
    %v374 = vld [vmem:[%s373] ss:$8 sm:$0xf0]
    %vm375 = vcmask 1047556
    %v376 = vsel %vm375, %v374, %v372
    %vm377 = vcmask 130048
    %s378 = scalar_lea.vmem %s1, 48
    %379 = vst.msk [vmem:[%s378] sm:$0xff] %vm377, %v376
    %s380 = scalar_lea.vmem [#allocation0], 448
    %v381 = vld [vmem:[%s380] ss:$8 sm:$0xf]
    %s382 = scalar_lea.vmem [#allocation0], 448
    %v383 = vld [vmem:[%s382] ss:$8 sm:$0xf0]
    %vm384 = vcmask 1047556
    %v385 = vsel %vm384, %v383, %v381
    %vm386 = vcmask 130048
    %s387 = scalar_lea.vmem %s1, 56
    %388 = vst.msk [vmem:[%s387] sm:$0xff] %vm386, %v385
    %s389 = scalar_lea.vmem [#allocation0], 3
    %v390 = vld [vmem:[%s389] ss:$8 sm:$0xf]
    %s391 = scalar_lea.vmem [#allocation0], 3
    %v392 = vld [vmem:[%s391] ss:$8 sm:$0xf0]
    %vm393 = vcmask 1047556
    %v394 = vsel %vm393, %v392, %v390
    %395 = vrot.lane.b32.xlu0 %v394, 48
    %v396 = vpop.permute.xlu0 %395
    %vm397 = vcmask 523648
    %398 = vst.msk [vmem:[%s1] sm:$0xff] %vm397, %v396
    %s399 = scalar_lea.vmem [#allocation0], 259
    %v400 = vld [vmem:[%s399] ss:$8 sm:$0xf]
    %s401 = scalar_lea.vmem [#allocation0], 259
    %v402 = vld [vmem:[%s401] ss:$8 sm:$0xf0]
    %vm403 = vcmask 1047556
    %v404 = vsel %vm403, %v402, %v400
    %405 = vrot.lane.b32.xlu0 %v404, 48
    %v406 = vpop.permute.xlu0 %405
    %vm407 = vcmask 523648
    %s408 = scalar_lea.vmem %s1, 32
    %409 = vst.msk [vmem:[%s408] sm:$0xff] %vm407, %v406
    %s410 = scalar_lea.vmem [#allocation0], 67
    %v411 = vld [vmem:[%s410] ss:$8 sm:$0xf]
    %s412 = scalar_lea.vmem [#allocation0], 67
    %v413 = vld [vmem:[%s412] ss:$8 sm:$0xf0]
    %vm414 = vcmask 1047556
    %v415 = vsel %vm414, %v413, %v411
    %416 = vrot.lane.b32.xlu0 %v415, 48
    %v417 = vpop.permute.xlu0 %416
    %vm418 = vcmask 523648
    %s419 = scalar_lea.vmem %s1, 8
    %420 = vst.msk [vmem:[%s419] sm:$0xff] %vm418, %v417
    %s421 = scalar_lea.vmem [#allocation0], 323
    %v422 = vld [vmem:[%s421] ss:$8 sm:$0xf]
    %s423 = scalar_lea.vmem [#allocation0], 323
    %v424 = vld [vmem:[%s423] ss:$8 sm:$0xf0]
    %vm425 = vcmask 1047556
    %v426 = vsel %vm425, %v424, %v422
    %427 = vrot.lane.b32.xlu0 %v426, 48
    %v428 = vpop.permute.xlu0 %427
    %vm429 = vcmask 523648
    %s430 = scalar_lea.vmem %s1, 40
    %431 = vst.msk [vmem:[%s430] sm:$0xff] %vm429, %v428
    %s432 = scalar_lea.vmem [#allocation0], 131
    %v433 = vld [vmem:[%s432] ss:$8 sm:$0xf]
    %s434 = scalar_lea.vmem [#allocation0], 131
    %v435 = vld [vmem:[%s434] ss:$8 sm:$0xf0]
    %vm436 = vcmask 1047556
    %v437 = vsel %vm436, %v435, %v433
    %438 = vrot.lane.b32.xlu0 %v437, 48
    %v439 = vpop.permute.xlu0 %438
    %vm440 = vcmask 523648
    %s441 = scalar_lea.vmem %s1, 16
    %442 = vst.msk [vmem:[%s441] sm:$0xff] %vm440, %v439
    %s443 = scalar_lea.vmem [#allocation0], 387
    %v444 = vld [vmem:[%s443] ss:$8 sm:$0xf]
    %s445 = scalar_lea.vmem [#allocation0], 387
    %v446 = vld [vmem:[%s445] ss:$8 sm:$0xf0]
    %vm447 = vcmask 1047556
    %v448 = vsel %vm447, %v446, %v444
    %449 = vrot.lane.b32.xlu0 %v448, 48
    %v450 = vpop.permute.xlu0 %449
    %vm451 = vcmask 523648
    %s452 = scalar_lea.vmem %s1, 48
    %453 = vst.msk [vmem:[%s452] sm:$0xff] %vm451, %v450
    %s454 = scalar_lea.vmem [#allocation0], 195
    %v455 = vld [vmem:[%s454] ss:$8 sm:$0xf]
    %s456 = scalar_lea.vmem [#allocation0], 195
    %v457 = vld [vmem:[%s456] ss:$8 sm:$0xf0]
    %vm458 = vcmask 1047556
    %v459 = vsel %vm458, %v457, %v455
    %460 = vrot.lane.b32.xlu0 %v459, 48
    %v461 = vpop.permute.xlu0 %460
    %vm462 = vcmask 523648
    %s463 = scalar_lea.vmem %s1, 24
    %464 = vst.msk [vmem:[%s463] sm:$0xff] %vm462, %v461
    %s465 = scalar_lea.vmem [#allocation0], 451
    %v466 = vld [vmem:[%s465] ss:$8 sm:$0xf]
    %s467 = scalar_lea.vmem [#allocation0], 451
    %v468 = vld [vmem:[%s467] ss:$8 sm:$0xf0]
    %vm469 = vcmask 1047556
    %v470 = vsel %vm469, %v468, %v466
    %471 = vrot.lane.b32.xlu0 %v470, 48
    %v472 = vpop.permute.xlu0 %471
    %vm473 = vcmask 523648
    %s474 = scalar_lea.vmem %s1, 56
    %475 = vst.msk [vmem:[%s474] sm:$0xff] %vm473, %v472
    %s476 = scalar_lea.vmem [#allocation0], 2
    %v477 = vld [vmem:[%s476] ss:$8 sm:$0xf]
    %s478 = scalar_lea.vmem [#allocation0], 2
    %v479 = vld [vmem:[%s478] ss:$8 sm:$0xf0]
    %vm480 = vcmask 1047556
    %v481 = vsel %vm480, %v479, %v477
    %482 = vrot.lane.b32.xlu0 %v481, 32
    %v483 = vpop.permute.xlu0 %482
    %vm484 = vcmask 392448
    %485 = vst.msk [vmem:[%s1] sm:$0xff] %vm484, %v483
    %s486 = scalar_lea.vmem [#allocation0], 258
    %v487 = vld [vmem:[%s486] ss:$8 sm:$0xf]
    %s488 = scalar_lea.vmem [#allocation0], 258
    %v489 = vld [vmem:[%s488] ss:$8 sm:$0xf0]
    %vm490 = vcmask 1047556
    %v491 = vsel %vm490, %v489, %v487
    %492 = vrot.lane.b32.xlu0 %v491, 32
    %v493 = vpop.permute.xlu0 %492
    %vm494 = vcmask 392448
    %s495 = scalar_lea.vmem %s1, 32
    %496 = vst.msk [vmem:[%s495] sm:$0xff] %vm494, %v493
    %s497 = scalar_lea.vmem [#allocation0], 66
    %v498 = vld [vmem:[%s497] ss:$8 sm:$0xf]
    %s499 = scalar_lea.vmem [#allocation0], 66
    %v500 = vld [vmem:[%s499] ss:$8 sm:$0xf0]
    %vm501 = vcmask 1047556
    %v502 = vsel %vm501, %v500, %v498
    %503 = vrot.lane.b32.xlu0 %v502, 32
    %v504 = vpop.permute.xlu0 %503
    %vm505 = vcmask 392448
    %s506 = scalar_lea.vmem %s1, 8
    %507 = vst.msk [vmem:[%s506] sm:$0xff] %vm505, %v504
    %s508 = scalar_lea.vmem [#allocation0], 322
    %v509 = vld [vmem:[%s508] ss:$8 sm:$0xf]
    %s510 = scalar_lea.vmem [#allocation0], 322
    %v511 = vld [vmem:[%s510] ss:$8 sm:$0xf0]
    %vm512 = vcmask 1047556
    %v513 = vsel %vm512, %v511, %v509
    %514 = vrot.lane.b32.xlu0 %v513, 32
    %v515 = vpop.permute.xlu0 %514
    %vm516 = vcmask 392448
    %s517 = scalar_lea.vmem %s1, 40
    %518 = vst.msk [vmem:[%s517] sm:$0xff] %vm516, %v515
    %s519 = scalar_lea.vmem [#allocation0], 130
    %v520 = vld [vmem:[%s519] ss:$8 sm:$0xf]
    %s521 = scalar_lea.vmem [#allocation0], 130
    %v522 = vld [vmem:[%s521] ss:$8 sm:$0xf0]
    %vm523 = vcmask 1047556
    %v524 = vsel %vm523, %v522, %v520
    %525 = vrot.lane.b32.xlu0 %v524, 32
    %v526 = vpop.permute.xlu0 %525
    %vm527 = vcmask 392448
    %s528 = scalar_lea.vmem %s1, 16
    %529 = vst.msk [vmem:[%s528] sm:$0xff] %vm527, %v526
    %s530 = scalar_lea.vmem [#allocation0], 386
    %v531 = vld [vmem:[%s530] ss:$8 sm:$0xf]
    %s532 = scalar_lea.vmem [#allocation0], 386
    %v533 = vld [vmem:[%s532] ss:$8 sm:$0xf0]
    %vm534 = vcmask 1047556
    %v535 = vsel %vm534, %v533, %v531
    %536 = vrot.lane.b32.xlu0 %v535, 32
    %v537 = vpop.permute.xlu0 %536
    %vm538 = vcmask 392448
    %s539 = scalar_lea.vmem %s1, 48
    %540 = vst.msk [vmem:[%s539] sm:$0xff] %vm538, %v537
    %s541 = scalar_lea.vmem [#allocation0], 194
    %v542 = vld [vmem:[%s541] ss:$8 sm:$0xf]
    %s543 = scalar_lea.vmem [#allocation0], 194
    %v544 = vld [vmem:[%s543] ss:$8 sm:$0xf0]
    %vm545 = vcmask 1047556
    %v546 = vsel %vm545, %v544, %v542
    %547 = vrot.lane.b32.xlu0 %v546, 32
    %v548 = vpop.permute.xlu0 %547
    %vm549 = vcmask 392448
    %s550 = scalar_lea.vmem %s1, 24
    %551 = vst.msk [vmem:[%s550] sm:$0xff] %vm549, %v548
    %s552 = scalar_lea.vmem [#allocation0], 450
    %v553 = vld [vmem:[%s552] ss:$8 sm:$0xf]
    %s554 = scalar_lea.vmem [#allocation0], 450
    %v555 = vld [vmem:[%s554] ss:$8 sm:$0xf0]
    %vm556 = vcmask 1047556
    %v557 = vsel %vm556, %v555, %v553
    %558 = vrot.lane.b32.xlu0 %v557, 32
    %v559 = vpop.permute.xlu0 %558
    %vm560 = vcmask 392448
    %s561 = scalar_lea.vmem %s1, 56
    %562 = vst.msk [vmem:[%s561] sm:$0xff] %vm560, %v559
    %s563 = scalar_lea.vmem [#allocation0], 1
    %v564 = vld [vmem:[%s563] ss:$8 sm:$0xf]
    %s565 = scalar_lea.vmem [#allocation0], 1
    %v566 = vld [vmem:[%s565] ss:$8 sm:$0xf0]
    %vm567 = vcmask 1047556
    %v568 = vsel %vm567, %v566, %v564
    %569 = vrot.lane.b32.xlu0 %v568, 16
    %v570 = vpop.permute.xlu0 %569
    %vm571 = vcmask 261248
    %572 = vst.msk [vmem:[%s1] sm:$0xff] %vm571, %v570
    %s573 = scalar_lea.vmem [#allocation0], 257
    %v574 = vld [vmem:[%s573] ss:$8 sm:$0xf]
    %s575 = scalar_lea.vmem [#allocation0], 257
    %v576 = vld [vmem:[%s575] ss:$8 sm:$0xf0]
    %vm577 = vcmask 1047556
    %v578 = vsel %vm577, %v576, %v574
    %579 = vrot.lane.b32.xlu0 %v578, 16
    %v580 = vpop.permute.xlu0 %579
    %vm581 = vcmask 261248
    %s582 = scalar_lea.vmem %s1, 32
    %583 = vst.msk [vmem:[%s582] sm:$0xff] %vm581, %v580
    %s584 = scalar_lea.vmem [#allocation0], 65
    %v585 = vld [vmem:[%s584] ss:$8 sm:$0xf]
    %s586 = scalar_lea.vmem [#allocation0], 65
    %v587 = vld [vmem:[%s586] ss:$8 sm:$0xf0]
    %vm588 = vcmask 1047556
    %v589 = vsel %vm588, %v587, %v585
    %590 = vrot.lane.b32.xlu0 %v589, 16
    %v591 = vpop.permute.xlu0 %590
    %vm592 = vcmask 261248
    %s593 = scalar_lea.vmem %s1, 8
    %594 = vst.msk [vmem:[%s593] sm:$0xff] %vm592, %v591
    %s595 = scalar_lea.vmem [#allocation0], 321
    %v596 = vld [vmem:[%s595] ss:$8 sm:$0xf]
    %s597 = scalar_lea.vmem [#allocation0], 321
    %v598 = vld [vmem:[%s597] ss:$8 sm:$0xf0]
    %vm599 = vcmask 1047556
    %v600 = vsel %vm599, %v598, %v596
    %601 = vrot.lane.b32.xlu0 %v600, 16
    %v602 = vpop.permute.xlu0 %601
    %vm603 = vcmask 261248
    %s604 = scalar_lea.vmem %s1, 40
    %605 = vst.msk [vmem:[%s604] sm:$0xff] %vm603, %v602
    %s606 = scalar_lea.vmem [#allocation0], 129
    %v607 = vld [vmem:[%s606] ss:$8 sm:$0xf]
    %s608 = scalar_lea.vmem [#allocation0], 129
    %v609 = vld [vmem:[%s608] ss:$8 sm:$0xf0]
    %vm610 = vcmask 1047556
    %v611 = vsel %vm610, %v609, %v607
    %612 = vrot.lane.b32.xlu0 %v611, 16
    %v613 = vpop.permute.xlu0 %612
    %vm614 = vcmask 261248
    %s615 = scalar_lea.vmem %s1, 16
    %616 = vst.msk [vmem:[%s615] sm:$0xff] %vm614, %v613
    %s617 = scalar_lea.vmem [#allocation0], 385
    %v618 = vld [vmem:[%s617] ss:$8 sm:$0xf]
    %s619 = scalar_lea.vmem [#allocation0], 385
    %v620 = vld [vmem:[%s619] ss:$8 sm:$0xf0]
    %vm621 = vcmask 1047556
    %v622 = vsel %vm621, %v620, %v618
    %623 = vrot.lane.b32.xlu0 %v622, 16
    %v624 = vpop.permute.xlu0 %623
    %vm625 = vcmask 261248
    %s626 = scalar_lea.vmem %s1, 48
    %627 = vst.msk [vmem:[%s626] sm:$0xff] %vm625, %v624
    %s628 = scalar_lea.vmem [#allocation0], 193
    %v629 = vld [vmem:[%s628] ss:$8 sm:$0xf]
    %s630 = scalar_lea.vmem [#allocation0], 193
    %v631 = vld [vmem:[%s630] ss:$8 sm:$0xf0]
    %vm632 = vcmask 1047556
    %v633 = vsel %vm632, %v631, %v629
    %634 = vrot.lane.b32.xlu0 %v633, 16
    %v635 = vpop.permute.xlu0 %634
    %vm636 = vcmask 261248
    %s637 = scalar_lea.vmem %s1, 24
    %638 = vst.msk [vmem:[%s637] sm:$0xff] %vm636, %v635
    %s639 = scalar_lea.vmem [#allocation0], 449
    %v640 = vld [vmem:[%s639] ss:$8 sm:$0xf]
    %s641 = scalar_lea.vmem [#allocation0], 449
    %v642 = vld [vmem:[%s641] ss:$8 sm:$0xf0]
    %vm643 = vcmask 1047556
    %v644 = vsel %vm643, %v642, %v640
    %645 = vrot.lane.b32.xlu0 %v644, 16
    %v646 = vpop.permute.xlu0 %645
    %vm647 = vcmask 261248
    %s648 = scalar_lea.vmem %s1, 56
    %649 = vst.msk [vmem:[%s648] sm:$0xff] %vm647, %v646

// kernel: tile.23
$region0: #{tile.23}
  #allocation0 [shape = 's32[1]{0}', space=sflag, size = 0x4, scoped, tag = 'scoped memory for tile.23']
  %s0 = inlined_call_operand.vmem [shape: f32[16], index: 0, kind: input, shape index: {}]
  %s1 = inlined_call_operand.vmem [shape: f32[4,16], index: 1, kind: output, shape index: {}]
  // Predicated region
  $region2: #{tile.23} parent=0 // pred_check
    _
  $region3: #{tile.23} parent=0 // pred_check_branch
    %3 = sbr.rel (0) target = $region5
  $region4: #{tile.23} parent=0 // pred_region
    _
  $region5: #{tile.23} parent=0 // pred_fallthru
    _
  %v4 = vld [vmem:[%s0] ss:$0 sm:$0xff]
  %5 = vst [vmem:[%s1] sm:$0xf] %v4

// kernel: generator_nodule_forward.1
$region0: #{generator_nodule_forward.1}
  #allocation0 [shape = 'u32[]', space=smem, size = 0x4, offset = 0x4, fixed_abs, tag = 'smem constant byte address 0x4 - core index']
  #allocation1 [shape = 'u32[144,128]{1,0:T(1,128)}', space=vmem, size = 0x12000, scoped, tag = 'internal scratch']
  %s0 = inlined_call_operand.vmem [shape: bf16[16,32], index: 0, kind: input, shape index: {}]
  %s1 = inlined_call_operand.vmem [shape: bf16[32,128], index: 1, kind: input, shape index: {}]
  %s2 = inlined_call_operand.vmem [shape: bf16[128,128], index: 2, kind: input, shape index: {}]
  %s3 = inlined_call_operand.vmem [shape: f32[128,128], index: 3, kind: input, shape index: {}]
  %s4 = inlined_call_operand.vmem [shape: f32[3,128], index: 4, kind: input, shape index: {}]
  %s5 = inlined_call_operand.vmem [shape: f32[16,128], index: 5, kind: output, shape index: {}]
  %s6 = sld [smem:[#allocation0]]
  $region30: #{generator_nodule_forward.1} parent=0
    _
  %s8 = ssub.s32 1, %s6
  %s9 = scalar_select 0, %s8, %s6
  // Predicated region
  $region2: #{generator_nodule_forward.1} parent=0 // pred_check
    _
  $region3: #{generator_nodule_forward.1} parent=0 // pred_check_branch
    %11 = sbr.rel (0) target = $region5
  $region4: #{generator_nodule_forward.1} parent=0 // pred_region
    _
  $region5: #{generator_nodule_forward.1} parent=0 // pred_fallthru
    _
  // Predicated region
  $region6: #{generator_nodule_forward.1} parent=0 // pred_check
    _
  $region7: #{generator_nodule_forward.1} parent=0 // pred_check_branch
    %13 = sbr.rel (0) target = $region9
  $region8: #{generator_nodule_forward.1} parent=0 // pred_region
    _
  $region9: #{generator_nodule_forward.1} parent=0 // pred_fallthru
    _
  // Predicated region
  $region10: #{generator_nodule_forward.1} parent=0 // pred_check
    _
  $region11: #{generator_nodule_forward.1} parent=0 // pred_check_branch
    %15 = sbr.rel (0) target = $region13
  $region12: #{generator_nodule_forward.1} parent=0 // pred_region
    _
  $region13: #{generator_nodule_forward.1} parent=0 // pred_fallthru
    _
  // Predicated region
  $region14: #{generator_nodule_forward.1} parent=0 // pred_check
    _
  $region15: #{generator_nodule_forward.1} parent=0 // pred_check_branch
    %17 = sbr.rel (0) target = $region17
  $region16: #{generator_nodule_forward.1} parent=0 // pred_region
    _
  $region17: #{generator_nodule_forward.1} parent=0 // pred_fallthru
    _
  // Predicated region
  $region18: #{generator_nodule_forward.1} parent=0 // pred_check
    _
  $region19: #{generator_nodule_forward.1} parent=0 // pred_check_branch
    %19 = sbr.rel (0) target = $region21
  $region20: #{generator_nodule_forward.1} parent=0 // pred_region
    _
  $region21: #{generator_nodule_forward.1} parent=0 // pred_fallthru
    _
  %v21 = vld [vmem:[%s0] sm:$0xf]
  %v22 = vld [vmem:[%s0 + $0x4] sm:$0xf]
  %v23 = vld [vmem:[%s1] sm:$0xf]
  %v24 = vld [vmem:[%s1 + $0x4] sm:$0xf]
  %v25 = vld [vmem:[%s1 + $0x8] sm:$0xf]
  %v26 = vld [vmem:[%s1 + $0xc] sm:$0xf]
  %v29 = vunpack.c.l.b16 %v21
  %v30 = vunpack.c.l.b16 %v22
  %v31 = vpack.c.b16 %v30, %v29
  %v36 = vunpack.c.l.b16 %v23
  %v37 = vunpack.c.l.b16 %v24
  %v38 = vunpack.c.l.b16 %v25
  %v39 = vunpack.c.l.b16 %v26
  %v40 = vpack.c.b16 %v37, %v36
  %v41 = vpack.c.b16 %v39, %v38
  %vm44 = vcmask 261120
  %v46 = vsel %vm44, %v31, 0
  %48 = vmatprep.subr.bf16.mxu0 0
  %49 = vmatpush1.bf16.msra.mxu0 %v40
  %50 = vmatprep.subr.bf16.mxu0 0
  %51 = vmatpush1.bf16.msra.mxu0 %v41
  %52 = vmatprep.subr.bf16.mxu0 0
  %53 = vmatpush1.bf16.msra.mxu0 0
  %54 = vmatprep.subr.bf16.mxu0 0
  %55 = vmatpush1.bf16.msra.mxu0 0
  %56 = vmatprep.subr.bf16.mxu0 0
  %57 = vmatpush1.bf16.msra.mxu0 0
  %58 = vmatprep.subr.bf16.mxu0 0
  %59 = vmatpush1.bf16.msra.mxu0 0
  %60 = vmatprep.subr.bf16.mxu0 0
  %61 = vmatpush1.bf16.msra.mxu0 0
  %62 = vmatprep.subr.bf16.mxu0 0
  %63 = vmatpush1.bf16.msra.mxu0 0
  %64 = vmatprep.subr.bf16.mxu0 0
  %65 = vmatpush1.bf16.msra.mxu0 0
  %66 = vmatprep.subr.bf16.mxu0 0
  %67 = vmatpush1.bf16.msra.mxu0 0
  %68 = vmatprep.subr.bf16.mxu0 0
  %69 = vmatpush1.bf16.msra.mxu0 0
  %70 = vmatprep.subr.bf16.mxu0 0
  %71 = vmatpush1.bf16.msra.mxu0 0
  %72 = vmatprep.subr.bf16.mxu0 0
  %73 = vmatpush1.bf16.msra.mxu0 0
  %74 = vmatprep.subr.bf16.mxu0 0
  %75 = vmatpush1.bf16.msra.mxu0 0
  %76 = vmatprep.subr.bf16.mxu0 0
  %77 = vmatpush1.bf16.msra.mxu0 0
  %78 = vmatprep.subr.bf16.mxu0 0
  %79 = vmatpush1.bf16.msra.mxu0 0
  %80 = vmatprep.mubr.bf16.mxu0 0
  %81 = vmatmul.mubr.bf16.gmra.mrb[0].mxu0 %v46
  %v82 = vpop.f32.mrb[0].mxu0
  %v83 = vadd.f32 0.0, %v82
  %v84 = vpop.f32.mrb[0].mxu0
  %v85 = vpop.f32.mrb[0].mxu0
  %v86 = vadd.f32 0.0, %v85
  %v87 = vpop.f32.mrb[0].mxu0
  %88 = vdwg.mxu0
  %v89 = vadd.f32 %v83, %v86
  %v90 = vrot.slane %v89, 4
  %v91 = vadd.f32 %v89, %v90
  %v92 = vrot.slane %v91, 2
  %v93 = vadd.f32 %v91, %v92
  %v94 = vrot.slane %v93, 1
  %v95 = vadd.f32 %v93, %v94
  %v96 = vmul.f32 %v83, %v83
  %v97 = vmul.f32 %v86, %v86
  %v98 = vadd.f32 %v96, %v97
  %v99 = vrot.slane %v98, 4
  %v100 = vadd.f32 %v98, %v99
  %v101 = vrot.slane %v100, 2
  %v102 = vadd.f32 %v100, %v101
  %v103 = vrot.slane %v102, 1
  %v104 = vadd.f32 %v102, %v103
  %v105 = vld [vmem:[%s3] sm:$0xff]
  %v106 = vld [vmem:[%s3 + $0x8] sm:$0xff]
  %v107 = vld [vmem:[%s3 + $0x10] sm:$0xff]
  %v108 = vld [vmem:[%s3 + $0x18] sm:$0xff]
  %v109 = vld [vmem:[%s3 + $0x20] sm:$0xff]
  %v110 = vld [vmem:[%s3 + $0x28] sm:$0xff]
  %v111 = vld [vmem:[%s3 + $0x30] sm:$0xff]
  %v112 = vld [vmem:[%s3 + $0x38] sm:$0xff]
  %v113 = vld [vmem:[%s3 + $0x40] sm:$0xff]
  %v114 = vld [vmem:[%s3 + $0x48] sm:$0xff]
  %v115 = vld [vmem:[%s3 + $0x50] sm:$0xff]
  %v116 = vld [vmem:[%s3 + $0x58] sm:$0xff]
  %v117 = vld [vmem:[%s3 + $0x60] sm:$0xff]
  %v118 = vld [vmem:[%s3 + $0x68] sm:$0xff]
  %v119 = vld [vmem:[%s3 + $0x70] sm:$0xff]
  %v120 = vld [vmem:[%s3 + $0x78] sm:$0xff]
  %v121 = vld [vmem:[%s4] sm:$0x1]
  %v122 = vld [vmem:[%s4 + $0x1] sm:$0x1]
  %123 = vmatprep.subr.mxu0 0.0
  %124 = vmatpush1.msra.mxu0 %v105
  %125 = vmatprep.subr.mxu0 0.0
  %126 = vmatpush1.msra.mxu0 %v106
  %127 = vmatprep.subr.mxu0 0.0
  %128 = vmatpush1.msra.mxu0 %v107
  %129 = vmatprep.subr.mxu0 0.0
  %130 = vmatpush1.msra.mxu0 %v108
  %131 = vmatprep.subr.mxu0 0.0
  %132 = vmatpush1.msra.mxu0 %v109
  %133 = vmatprep.subr.mxu0 0.0
  %134 = vmatpush1.msra.mxu0 %v110
  %135 = vmatprep.subr.mxu0 0.0
  %136 = vmatpush1.msra.mxu0 %v111
  %137 = vmatprep.subr.mxu0 0.0
  %138 = vmatpush1.msra.mxu0 %v112
  %139 = vmatprep.subr.mxu0 0.0
  %140 = vmatpush1.msra.mxu0 %v113
  %141 = vmatprep.subr.mxu0 0.0
  %142 = vmatpush1.msra.mxu0 %v114
  %143 = vmatprep.subr.mxu0 0.0
  %144 = vmatpush1.msra.mxu0 %v115
  %145 = vmatprep.subr.mxu0 0.0
  %146 = vmatpush1.msra.mxu0 %v116
  %147 = vmatprep.subr.mxu0 0.0
  %148 = vmatpush1.msra.mxu0 %v117
  %149 = vmatprep.subr.mxu0 0.0
  %150 = vmatpush1.msra.mxu0 %v118
  %151 = vmatprep.subr.mxu0 0.0
  %152 = vmatpush1.msra.mxu0 %v119
  %153 = vmatprep.subr.mxu0 0.0
  %154 = vmatpush1.msra.mxu0 %v120
  %155 = vmatprep.subr.mxu0 0.0
  %156 = vmatpush1.msra.mxu0 0.0
  %157 = vmatprep.subr.mxu0 0.0
  %158 = vmatpush1.msra.mxu0 0.0
  %159 = vmatprep.subr.mxu0 0.0
  %160 = vmatpush1.msra.mxu0 0.0
  %161 = vmatprep.subr.mxu0 0.0
  %162 = vmatpush1.msra.mxu0 0.0
  %163 = vmatprep.subr.mxu0 0.0
  %164 = vmatpush1.msra.mxu0 0.0
  %165 = vmatprep.subr.mxu0 0.0
  %166 = vmatpush1.msra.mxu0 0.0
  %167 = vmatprep.subr.mxu0 0.0
  %168 = vmatpush1.msra.mxu0 0.0
  %169 = vmatprep.subr.mxu0 0.0
  %170 = vmatpush1.msra.mxu0 0.0
  %171 = vmatprep.subr.mxu0 0.0
  %172 = vmatpush1.msra.mxu0 0.0
  %173 = vmatprep.subr.mxu0 0.0
  %174 = vmatpush1.msra.mxu0 0.0
  %175 = vmatprep.subr.mxu0 0.0
  %176 = vmatpush1.msra.mxu0 0.0
  %177 = vmatprep.subr.mxu0 0.0
  %178 = vmatpush1.msra.mxu0 0.0
  %179 = vmatprep.subr.mxu0 0.0
  %180 = vmatpush1.msra.mxu0 0.0
  %181 = vmatprep.subr.mxu0 0.0
  %182 = vmatpush1.msra.mxu0 0.0
  %183 = vmatprep.subr.mxu0 0.0
  %184 = vmatpush1.msra.mxu0 0.0
  %185 = vmatprep.subr.mxu0 0.0
  %186 = vmatpush1.msra.mxu0 0.0
  %187 = vmatprep.mubr.f32.mxu0 0.0
  %188 = vmatmul.mubr.f32.gmra.mrb[0].mxu0 %v95
  %v189 = vpop.f32.mrb[0].mxu0
  %v190 = vadd.f32 0.0, %v189
  %v191 = vpop.f32.mrb[0].mxu0
  %192 = vdwg.mxu0
  %193 = vmatprep.subr.mxu0 0.0
  %194 = vmatpush1.msra.mxu0 %v105
  %195 = vmatprep.subr.mxu0 0.0
  %196 = vmatpush1.msra.mxu0 %v106
  %197 = vmatprep.subr.mxu0 0.0
  %198 = vmatpush1.msra.mxu0 %v107
  %199 = vmatprep.subr.mxu0 0.0
  %200 = vmatpush1.msra.mxu0 %v108
  %201 = vmatprep.subr.mxu0 0.0
  %202 = vmatpush1.msra.mxu0 %v109
  %203 = vmatprep.subr.mxu0 0.0
  %204 = vmatpush1.msra.mxu0 %v110
  %205 = vmatprep.subr.mxu0 0.0
  %206 = vmatpush1.msra.mxu0 %v111
  %207 = vmatprep.subr.mxu0 0.0
  %208 = vmatpush1.msra.mxu0 %v112
  %209 = vmatprep.subr.mxu0 0.0
  %210 = vmatpush1.msra.mxu0 %v113
  %211 = vmatprep.subr.mxu0 0.0
  %212 = vmatpush1.msra.mxu0 %v114
  %213 = vmatprep.subr.mxu0 0.0
  %214 = vmatpush1.msra.mxu0 %v115
  %215 = vmatprep.subr.mxu0 0.0
  %216 = vmatpush1.msra.mxu0 %v116
  %217 = vmatprep.subr.mxu0 0.0
  %218 = vmatpush1.msra.mxu0 %v117
  %219 = vmatprep.subr.mxu0 0.0
  %220 = vmatpush1.msra.mxu0 %v118
  %221 = vmatprep.subr.mxu0 0.0
  %222 = vmatpush1.msra.mxu0 %v119
  %223 = vmatprep.subr.mxu0 0.0
  %224 = vmatpush1.msra.mxu0 %v120
  %225 = vmatprep.subr.mxu0 0.0
  %226 = vmatpush1.msra.mxu0 0.0
  %227 = vmatprep.subr.mxu0 0.0
  %228 = vmatpush1.msra.mxu0 0.0
  %229 = vmatprep.subr.mxu0 0.0
  %230 = vmatpush1.msra.mxu0 0.0
  %231 = vmatprep.subr.mxu0 0.0
  %232 = vmatpush1.msra.mxu0 0.0
  %233 = vmatprep.subr.mxu0 0.0
  %234 = vmatpush1.msra.mxu0 0.0
  %235 = vmatprep.subr.mxu0 0.0
  %236 = vmatpush1.msra.mxu0 0.0
  %237 = vmatprep.subr.mxu0 0.0
  %238 = vmatpush1.msra.mxu0 0.0
  %239 = vmatprep.subr.mxu0 0.0
  %240 = vmatpush1.msra.mxu0 0.0
  %241 = vmatprep.subr.mxu0 0.0
  %242 = vmatpush1.msra.mxu0 0.0
  %243 = vmatprep.subr.mxu0 0.0
  %244 = vmatpush1.msra.mxu0 0.0
  %245 = vmatprep.subr.mxu0 0.0
  %246 = vmatpush1.msra.mxu0 0.0
  %247 = vmatprep.subr.mxu0 0.0
  %248 = vmatpush1.msra.mxu0 0.0
  %249 = vmatprep.subr.mxu0 0.0
  %250 = vmatpush1.msra.mxu0 0.0
  %251 = vmatprep.subr.mxu0 0.0
  %252 = vmatpush1.msra.mxu0 0.0
  %253 = vmatprep.subr.mxu0 0.0
  %254 = vmatpush1.msra.mxu0 0.0
  %255 = vmatprep.subr.mxu0 0.0
  %256 = vmatpush1.msra.mxu0 0.0
  %257 = vmatprep.mubr.f32.mxu0 0.0
  %258 = vmatmul.mubr.f32.gmra.mrb[0].mxu0 %v104
  %v259 = vpop.f32.mrb[0].mxu0
  %v260 = vadd.f32 0.0, %v259
  %v261 = vpop.f32.mrb[0].mxu0
  %262 = vdwg.mxu0
  %v263 = vmul.f32 %v190, 0.0625
  %v264 = vmul.f32 %v260, 0.0625
  %v265 = vmul.f32 %v263, %v263
  %v266 = vsub.f32 %v264, %v265
  %v267 = vmax.f32 %v266, 0.0
  %v268 = vadd.f32 %v267, 1e-05
  %v269 = vrsqrt.pop %v268
  %v270 = vmul.f32 %v121, %v269
  %v271 = vmul.f32 %v263, %v270
  %v272 = vsub.f32 %v122, %v271
  %v273 = vlaneseq
  %v274 = vshrl.u32 %v273, 7
  %v275 = vsub.s32 0, %v274
  %v276 = vrot.slane %v270, %v275
  %v277 = vmul.f32 %v83, %v276
  %v278 = vmul.f32 %v86, %v276
  %v279 = vlaneseq
  %v280 = vshrl.u32 %v279, 7
  %v281 = vsub.s32 0, %v280
  %v282 = vrot.slane %v272, %v281
  %v283 = vadd.f32 %v277, %v282
  %v284 = vadd.f32 %v278, %v282
  %v285 = vmax.f32 %v283, 0.0
  %v286 = vmax.f32 %v284, 0.0
  %v287 = vpack.c.bf16 %v286, %v285
  %v288 = vld [vmem:[%s2] sm:$0xf]
  %v289 = vld [vmem:[%s2 + $0x4] sm:$0xf]
  %v290 = vld [vmem:[%s2 + $0x8] sm:$0xf]
  %v291 = vld [vmem:[%s2 + $0xc] sm:$0xf]
  %v292 = vld [vmem:[%s2 + $0x10] sm:$0xf]
  %v293 = vld [vmem:[%s2 + $0x14] sm:$0xf]
  %v294 = vld [vmem:[%s2 + $0x18] sm:$0xf]
  %v295 = vld [vmem:[%s2 + $0x1c] sm:$0xf]
  %v296 = vld [vmem:[%s2 + $0x20] sm:$0xf]
  %v297 = vld [vmem:[%s2 + $0x24] sm:$0xf]
  %v298 = vld [vmem:[%s2 + $0x28] sm:$0xf]
  %v299 = vld [vmem:[%s2 + $0x2c] sm:$0xf]
  %v300 = vld [vmem:[%s2 + $0x30] sm:$0xf]
  %v301 = vld [vmem:[%s2 + $0x34] sm:$0xf]
  %v302 = vld [vmem:[%s2 + $0x38] sm:$0xf]
  %v303 = vld [vmem:[%s2 + $0x3c] sm:$0xf]
  %v304 = vld [vmem:[%s4 + $0x2] sm:$0x1]
  %v305 = vlaneseq
  %v306 = vshrl.u32 %v305, 7
  %v307 = vsub.s32 0, %v306
  %v308 = vrot.slane %v304, %v307
  %v325 = vunpack.c.l.b16 %v288
  %v326 = vunpack.c.l.b16 %v289
  %v327 = vunpack.c.l.b16 %v290
  %v328 = vunpack.c.l.b16 %v291
  %v329 = vunpack.c.l.b16 %v292
  %v330 = vunpack.c.l.b16 %v293
  %v331 = vunpack.c.l.b16 %v294
  %v332 = vunpack.c.l.b16 %v295
  %v333 = vunpack.c.l.b16 %v296
  %v334 = vunpack.c.l.b16 %v297
  %v335 = vunpack.c.l.b16 %v298
  %v336 = vunpack.c.l.b16 %v299
  %v337 = vunpack.c.l.b16 %v300
  %v338 = vunpack.c.l.b16 %v301
  %v339 = vunpack.c.l.b16 %v302
  %v340 = vunpack.c.l.b16 %v303
  %v341 = vpack.c.b16 %v326, %v325
  %v342 = vpack.c.b16 %v328, %v327
  %v343 = vpack.c.b16 %v330, %v329
  %v344 = vpack.c.b16 %v332, %v331
  %v345 = vpack.c.b16 %v334, %v333
  %v346 = vpack.c.b16 %v336, %v335
  %v347 = vpack.c.b16 %v338, %v337
  %v348 = vpack.c.b16 %v340, %v339
  %357 = vmatprep.subr.bf16.mxu0 0
  %358 = vmatpush1.bf16.msra.mxu0 %v341
  %359 = vmatprep.subr.bf16.mxu0 0
  %360 = vmatpush1.bf16.msra.mxu0 %v342
  %361 = vmatprep.subr.bf16.mxu0 0
  %362 = vmatpush1.bf16.msra.mxu0 %v343
  %363 = vmatprep.subr.bf16.mxu0 0
  %364 = vmatpush1.bf16.msra.mxu0 %v344
  %365 = vmatprep.subr.bf16.mxu0 0
  %366 = vmatpush1.bf16.msra.mxu0 %v345
  %367 = vmatprep.subr.bf16.mxu0 0
  %368 = vmatpush1.bf16.msra.mxu0 %v346
  %369 = vmatprep.subr.bf16.mxu0 0
  %370 = vmatpush1.bf16.msra.mxu0 %v347
  %371 = vmatprep.subr.bf16.mxu0 0
  %372 = vmatpush1.bf16.msra.mxu0 %v348
  %373 = vmatprep.subr.bf16.mxu0 0
  %374 = vmatpush1.bf16.msra.mxu0 0
  %375 = vmatprep.subr.bf16.mxu0 0
  %376 = vmatpush1.bf16.msra.mxu0 0
  %377 = vmatprep.subr.bf16.mxu0 0
  %378 = vmatpush1.bf16.msra.mxu0 0
  %379 = vmatprep.subr.bf16.mxu0 0
  %380 = vmatpush1.bf16.msra.mxu0 0
  %381 = vmatprep.subr.bf16.mxu0 0
  %382 = vmatpush1.bf16.msra.mxu0 0
  %383 = vmatprep.subr.bf16.mxu0 0
  %384 = vmatpush1.bf16.msra.mxu0 0
  %385 = vmatprep.subr.bf16.mxu0 0
  %386 = vmatpush1.bf16.msra.mxu0 0
  %387 = vmatprep.subr.bf16.mxu0 0
  %388 = vmatpush1.bf16.msra.mxu0 0
  %389 = vmatprep.mubr.bf16.mxu0 0
  %390 = vmatmul.mubr.bf16.gmra.mrb[0].mxu0 %v287
  %v391 = vpop.f32.mrb[0].mxu0
  %v392 = vadd.f32 %v308, %v391
  %v393 = vpop.f32.mrb[0].mxu0
  %v394 = vpop.f32.mrb[0].mxu0
  %v395 = vadd.f32 %v308, %v394
  %v396 = vpop.f32.mrb[0].mxu0
  %397 = vdwg.mxu0
  %v398 = vmul.f32 %v392, 0.5
  %v399 = vmul.f32 %v395, 0.5
  %v400 = vtanh.pop %v398
  %v401 = vtanh.pop %v399
  %v402 = vmul.f32 %v400, 0.5
  %v403 = vmul.f32 %v401, 0.5
  %v404 = vadd.f32 %v402, 0.5
  %v405 = vadd.f32 %v403, 0.5
  %406 = vst [vmem:[%s5] sm:$0xff] %v404
  %407 = vst [vmem:[%s5 + $0x8] sm:$0xff] %v405
  // Predicated region
  $region22: #{generator_nodule_forward.1} parent=0 // pred_check
    _
  $region23: #{generator_nodule_forward.1} parent=0 // pred_check_branch
    %409 = sbr.rel (0) target = $region25
  $region24: #{generator_nodule_forward.1} parent=0 // pred_region
    _
  $region25: #{generator_nodule_forward.1} parent=0 // pred_fallthru
    _
  // Predicated region
  $region26: #{generator_nodule_forward.1} parent=0 // pred_check
    _
  $region27: #{generator_nodule_forward.1} parent=0 // pred_check_branch
    %411 = sbr.rel (0) target = $region29
  $region28: #{generator_nodule_forward.1} parent=0 // pred_region
    _
  $region29: #{generator_nodule_forward.1} parent=0 // pred_fallthru
    _

</llo_original>
